<compile_context>
chip_gen: v5e
topology: v5e:2x2
jax: 0.10.0
libtpu: 0.0.40
codegen_flags: <defaults>
</compile_context>

<pallas_src>
import functools

import jax
import jax.numpy as jnp
from jax.experimental import pallas as pl
from jax.experimental.pallas import tpu as pltpu

_M_ALIGN = 16      # sublane alignment (covers bf16 packing)
_TM_MAX = 256      # row-tile cap: bounds VMEM well under v7x's 64 MiB


# ----------------------------- Pallas kernels ------------------------------

def _gemm_bias_act_kernel(x_ref, w_ref, b_ref, o_ref, *, act):
    """o = act(x @ w + b); bf16 operands, f32 accumulation."""
    acc = jnp.dot(x_ref[...], w_ref[...], preferred_element_type=jnp.float32)
    acc = acc + b_ref[...]
    if act == "relu":
        acc = jnp.maximum(acc, 0.0)
    o_ref[...] = acc.astype(o_ref.dtype)


def _noisy_head_kernel(cf_ref, wh_ref, bh_ref, s2w_ref, s2b_ref,
                       wno_ref, bno_ref, o_ref, *, hidden, na_p):
    """Fused fc / sigma_layers / noisy_out head (see module docstring)."""
    h = jnp.dot(cf_ref[...], wh_ref[...], preferred_element_type=jnp.float32)
    h = jnp.maximum(h + bh_ref[...], 0.0)                 # (TM, 2*hidden)
    fc_out = h[:, :hidden]
    sh = h[:, hidden:]
    # sigma via elementwise mul + lane reduce (VPU + XLU), not an N=1 GEMM.
    sigma = jnp.sum(sh * s2w_ref[...], axis=-1, keepdims=True) + s2b_ref[...]
    z = jnp.dot(fc_out.astype(wno_ref.dtype), wno_ref[...],
                preferred_element_type=jnp.float32) + bno_ref[...]
    mu = z[:, :na_p]
    noise = z[:, na_p:]
    o_ref[...] = mu + sigma * noise


# ------------------------------ wrappers ------------------------------------

def _round_up(x, m):
    return (x + m - 1) // m * m


def _tile_rows(x):
    """Pad rows to a tile-friendly count; return (x_padded, tm)."""
    m = x.shape[0]
    mp = _round_up(m, _M_ALIGN)
    if mp > _TM_MAX:
        tm = _TM_MAX
        mp = _round_up(m, tm)
    else:
        tm = mp
    if mp != m:
        x = jnp.pad(x, ((0, mp - m), (0, 0)))
    return x, tm


def pallas_gemm_bias_act(x, w, b, *, act="none", out_dtype=jnp.float32):
    """x: (M, K) -> act(x @ w + b): (M, N).
    w: (Kp, N) bf16 with Kp >= K (zero-padded rows), b: (1, N) f32."""
    m, k = x.shape
    kp, n = w.shape
    x = x.astype(jnp.bfloat16)
    if kp != k:
        x = jnp.pad(x, ((0, 0), (0, kp - k)))
    x, tm = _tile_rows(x)
    mp = x.shape[0]
    out = pl.pallas_call(
        functools.partial(_gemm_bias_act_kernel, act=act),
        out_shape=jax.ShapeDtypeStruct((mp, n), out_dtype),
        grid=(mp // tm,),
        in_specs=[
            pl.BlockSpec((tm, kp), lambda i: (i, 0)),
            pl.BlockSpec((kp, n), lambda i: (0, 0)),
            pl.BlockSpec((1, n), lambda i: (0, 0)),
        ],
        out_specs=pl.BlockSpec((tm, n), lambda i: (i, 0)),
        compiler_params=pltpu.CompilerParams(
            dimension_semantics=("parallel",)),
    )(x, w, b)
    return out[:m] if mp != m else out


def pallas_noisy_head(conv_flat, pk, n_actions):
    """conv_flat: (B, Kc) -> q-values (B, n_actions) via one fused kernel."""
    b, kc = conv_flat.shape
    hidden = pk["bh"].shape[1] // 2
    na_p = pk["wno"].shape[1] // 2
    x = conv_flat.astype(jnp.bfloat16)
    x, tm = _tile_rows(x)
    mp = x.shape[0]
    out = pl.pallas_call(
        functools.partial(_noisy_head_kernel, hidden=hidden, na_p=na_p),
        out_shape=jax.ShapeDtypeStruct((mp, na_p), jnp.float32),
        grid=(mp // tm,),
        in_specs=[
            pl.BlockSpec((tm, kc), lambda i: (i, 0)),
            pl.BlockSpec((kc, 2 * hidden), lambda i: (0, 0)),
            pl.BlockSpec((1, 2 * hidden), lambda i: (0, 0)),
            pl.BlockSpec((1, hidden), lambda i: (0, 0)),
            pl.BlockSpec((1, 1), lambda i: (0, 0)),
            pl.BlockSpec((hidden, 2 * na_p), lambda i: (0, 0)),
            pl.BlockSpec((1, 2 * na_p), lambda i: (0, 0)),
        ],
        out_specs=pl.BlockSpec((tm, na_p), lambda i: (i, 0)),
        compiler_params=pltpu.CompilerParams(
            dimension_semantics=("parallel",)),
    )(x, pk["wh"], pk["bh"], pk["s2w"], pk["s2b"], pk["wno"], pk["bno"])
    return out[:b, :n_actions]


# ------------------------------- model glue ---------------------------------

def _im2col_nhwc(x, k, s):
    """x: (B, H, W, C) -> patches (B*Ho*Wo, k*k*C); column order (kh, kw, c)."""
    b, h, w, c = x.shape
    ho = (h - k) // s + 1
    wo = (w - k) // s + 1
    idx_h = (jnp.arange(ho) * s)[:, None] + jnp.arange(k)[None, :]   # (Ho, k)
    idx_w = (jnp.arange(wo) * s)[:, None] + jnp.arange(k)[None, :]   # (Wo, k)
    xh = x[:, idx_h, :, :]                     # (B, Ho, k, W, C)
    xhw = xh[:, :, :, idx_w, :]                # (B, Ho, k, Wo, k, C)
    p = jnp.transpose(xhw, (0, 1, 3, 2, 4, 5))  # (B, Ho, Wo, kh, kw, C)
    return p.reshape(b * ho * wo, k * k * c), ho, wo


def conv2d_relu_nhwc(x, w_flat, b_row, ksize, stride):
    """x: (B, H, W, C) bf16, w_flat: (Kp, O) bf16, b_row: (1, O) f32."""
    b = x.shape[0]
    patches, ho, wo = _im2col_nhwc(x, ksize, stride)
    y = pallas_gemm_bias_act(patches, w_flat, b_row, act="relu",
                             out_dtype=jnp.bfloat16)
    return y.reshape(b, ho, wo, w_flat.shape[1])


def init_params(key, input_shape, n_actions):
    """PyTorch-layout parameters (same structure/semantics as the nn.Module)."""
    c, h, w = input_shape
    ks = jax.random.split(key, 16)
    sc = 0.05

    def nrm(k, shape, s=sc):
        return jax.random.normal(k, shape, jnp.float32) * s

    h1, w1 = (h - 8) // 4 + 1, (w - 8) // 4 + 1
    h2, w2 = (h1 - 4) // 2 + 1, (w1 - 4) // 2 + 1
    h3, w3 = h2 - 3 + 1, w2 - 3 + 1
    conv_out = 64 * h3 * w3

    return dict(
        c1w=nrm(ks[0], (32, c, 8, 8)), c1b=nrm(ks[1], (32,)),
        c2w=nrm(ks[2], (64, 32, 4, 4)), c2b=nrm(ks[3], (64,)),
        c3w=nrm(ks[4], (64, 64, 3, 3)), c3b=nrm(ks[5], (64,)),
        fcw=nrm(ks[6], (conv_out, 512)), fcb=nrm(ks[7], (512,)),
        s1w=nrm(ks[8], (conv_out, 512)), s1b=nrm(ks[9], (512,)),
        s2w=nrm(ks[10], (512, 1)), s2b=nrm(ks[11], (1,)),
        # NoisyLinearExt(512, n_actions) params + a fixed noise sample
        nmu_w=nrm(ks[12], (512, n_actions)), nmu_b=nrm(ks[13], (n_actions,)),
        nsig_w=jnp.full((512, n_actions), 0.017, jnp.float32),
        nsig_b=jnp.full((n_actions,), 0.017, jnp.float32),
        neps_w=jax.random.normal(ks[14], (512, n_actions), jnp.float32),
        neps_b=jax.random.normal(ks[15], (n_actions,), jnp.float32),
    )


def pack_params(p, input_shape, n_actions):
    """One-time packing: NHWC-flattened, K-padded, bf16 weights / f32 biases."""
    _, h, w = input_shape
    h1, w1 = (h - 8) // 4 + 1, (w - 8) // 4 + 1
    h2, w2 = (h1 - 4) // 2 + 1, (w1 - 4) // 2 + 1
    h3, w3 = h2 - 3 + 1, w2 - 3 + 1

    def conv_w(wt, scale=1.0):
        o, ci, kh, kw = wt.shape
        wf = (jnp.transpose(wt, (2, 3, 1, 0)) * scale).reshape(kh * kw * ci, o)
        kpad = (-wf.shape[0]) % 128
        if kpad:
            wf = jnp.pad(wf, ((0, kpad), (0, 0)))
        return wf.astype(jnp.bfloat16)

    def brow(b_):
        return b_.reshape(1, -1).astype(jnp.float32)

    # fc / s1 rows are in PyTorch's NCHW flatten order (c, h3, w3);
    # reorder to the NHWC flatten order (h3, w3, c) used by conv_flat.
    def head_w(wm):
        wm = wm.reshape(64, h3, w3, -1)
        return jnp.transpose(wm, (1, 2, 0, 3)).reshape(h3 * w3 * 64, -1)

    na_p = _round_up(n_actions, 128)

    def pad_cols(a, n):
        return jnp.pad(a, ((0, 0), (0, n - a.shape[1])))

    w_noise = p["nsig_w"] * p["neps_w"]
    b_noise = p["nsig_b"] * p["neps_b"]

    return dict(
        c1w=conv_w(p["c1w"], scale=1.0 / 256.0), c1b=brow(p["c1b"]),
        c2w=conv_w(p["c2w"]), c2b=brow(p["c2b"]),
        c3w=conv_w(p["c3w"]), c3b=brow(p["c3b"]),
        wh=jnp.concatenate([head_w(p["fcw"]), head_w(p["s1w"])],
                           axis=1).astype(jnp.bfloat16),
        bh=jnp.concatenate([p["fcb"], p["s1b"]]).reshape(1, -1).astype(jnp.float32),
        s2w=p["s2w"].reshape(1, -1).astype(jnp.float32),
        s2b=p["s2b"].reshape(1, 1).astype(jnp.float32),
        wno=jnp.concatenate([pad_cols(p["nmu_w"], na_p),
                             pad_cols(w_noise, na_p)], axis=1).astype(jnp.bfloat16),
        bno=jnp.concatenate([jnp.pad(p["nmu_b"], (0, na_p - n_actions)),
                             jnp.pad(b_noise, (0, na_p - n_actions))]
                            ).reshape(1, -1).astype(jnp.float32),
    )


def noisy_dqn_forward(x_u8, pk, n_actions):
    """x_u8: (B, C, H, W) uint8 frames (NCHW, like PyTorch)."""
    # NCHW uint8 -> NHWC bf16 once; the /256 scale is folded into c1w (exact).
    x = jnp.transpose(x_u8, (0, 2, 3, 1)).astype(jnp.bfloat16)
    h = conv2d_relu_nhwc(x, pk["c1w"], pk["c1b"], 8, 4)
    h = conv2d_relu_nhwc(h, pk["c2w"], pk["c2b"], 4, 2)
    h = conv2d_relu_nhwc(h, pk["c3w"], pk["c3b"], 3, 1)
    conv_flat = h.reshape(h.shape[0], -1)          # NHWC flatten (h3, w3, c)
    # TODO(synk): model.NoisyLinearExt is not defined in the source file; we
    # assume out = x @ W_mu + b_mu + sigma * (x @ (W_sig*eps_w) + b_sig*eps_b).
    return pallas_noisy_head(conv_flat, pk, n_actions)


if __name__ == "__main__":
    key = jax.random.PRNGKey(0)
    k_x, k_p = jax.random.split(key)

    batch, n_actions = 2, 6
    input_shape = (4, 36, 36)   # smallest spatial size surviving the conv stack

    params = init_params(k_p, input_shape, n_actions)
    packed = pack_params(params, input_shape, n_actions)
    x = jax.random.randint(k_x, (batch,) + input_shape, 0, 256, jnp.uint8)

    fwd = jax.jit(functools.partial(noisy_dqn_forward, n_actions=n_actions))
    out = fwd(x, packed)
    out = jax.block_until_ready(out)
    assert out.shape == (batch, n_actions), out.shape
    assert out.dtype == jnp.float32
    print("KERNEL_OK")
</pallas_src>

<mosaic_0001>
module attributes {stable_mosaic.version = 11 : i64} {
  func.func @_gemm_bias_act_kernel(%arg0: i32, %arg1: memref<128x256xbf16, #tpu.memory_space<vmem>>, %arg2: memref<256x32xbf16, #tpu.memory_space<vmem>>, %arg3: memref<1x32xf32, #tpu.memory_space<vmem>>, %arg4: memref<128x32xbf16, #tpu.memory_space<vmem>>) attributes {dimension_semantics = [#tpu.dimension_semantics<parallel>], iteration_bounds = array<i64: 1>, scalar_prefetch = 0 : i64, scratch_operands = 0 : i64, tpu.core_type = #tpu.core_type<tc>, window_params = [{transform_indices = @transform_0, window_bounds = array<i64: 128, 256>}, {pipeline_mode = #tpu.pipeline_mode<synchronous>, transform_indices = @transform_1, window_bounds = array<i64: 256, 32>}, {pipeline_mode = #tpu.pipeline_mode<synchronous>, transform_indices = @transform_2, window_bounds = array<i64: 1, 32>}, {transform_indices = @transform_3, window_bounds = array<i64: 128, 32>}]} {
    %c0 = arith.constant 0 : index
    %c0_0 = arith.constant 0 : index
    %0 = vector.load %arg1[%c0, %c0_0] : memref<128x256xbf16, #tpu.memory_space<vmem>>, vector<128x256xbf16>
    %c0_1 = arith.constant 0 : index
    %c0_2 = arith.constant 0 : index
    %1 = vector.load %arg2[%c0_1, %c0_2] : memref<256x32xbf16, #tpu.memory_space<vmem>>, vector<256x32xbf16>
    %cst = arith.constant dense<0.000000e+00> : vector<128x32xf32>
    %2 = tpu.matmul %0, %1, %cst {dimension_numbers = #tpu.dot_dimension_numbers<[1], [0], [0], [1], [0, 0, 1, 1], [], []>} : vector<128x256xbf16>, vector<256x32xbf16>, vector<128x32xf32> -> vector<128x32xf32>
    %c0_3 = arith.constant 0 : index
    %c0_4 = arith.constant 0 : index
    %3 = vector.load %arg3[%c0_3, %c0_4] : memref<1x32xf32, #tpu.memory_space<vmem>>, vector<1x32xf32>
    %4 = vector.broadcast %3 : vector<1x32xf32> to vector<128x32xf32>
    %5 = arith.addf %2, %4 : vector<128x32xf32>
    %cst_5 = arith.constant 0.000000e+00 : f32
    %6 = vector.broadcast %cst_5 : f32 to vector<128x32xf32>
    %7 = arith.maximumf %5, %6 : vector<128x32xf32>
    %8 = arith.truncf %7 : vector<128x32xf32> to vector<128x32xbf16>
    %c0_6 = arith.constant 0 : index
    %c0_7 = arith.constant 0 : index
    %9 = vector.load %arg4[%c0_6, %c0_7] : memref<128x32xbf16, #tpu.memory_space<vmem>>, vector<128x32xbf16>
    tpu.vector_store %arg4[%c0_6, %c0_7], %8 {strides = array<i32>} : memref<128x32xbf16, #tpu.memory_space<vmem>>, vector<128x32xbf16>,
    return
  }
  func.func @transform_0(%arg0: i32) -> (i32, i32) {
    %c0_i32 = arith.constant 0 : i32
    %c0_i32_0 = arith.constant 0 : i32
    return %arg0, %c0_i32 : i32, i32
  }
  func.func @transform_1(%arg0: i32) -> (i32, i32) {
    %c0_i32 = arith.constant 0 : i32
    %c0_i32_0 = arith.constant 0 : i32
    %c0_i32_1 = arith.constant 0 : i32
    return %c0_i32, %c0_i32_0 : i32, i32
  }
  func.func @transform_2(%arg0: i32) -> (i32, i32) {
    %c0_i32 = arith.constant 0 : i32
    %c0_i32_0 = arith.constant 0 : i32
    %c0_i32_1 = arith.constant 0 : i32
    return %c0_i32, %c0_i32_0 : i32, i32
  }
  func.func @transform_3(%arg0: i32) -> (i32, i32) {
    %c0_i32 = arith.constant 0 : i32
    %c0_i32_0 = arith.constant 0 : i32
    return %arg0, %c0_i32 : i32, i32
  }
}

module attributes {stable_mosaic.version = 11 : i64} {
  func.func @_gemm_bias_act_kernel(%arg0: i32, %arg1: memref<32x512xbf16, #tpu.memory_space<vmem>>, %arg2: memref<512x64xbf16, #tpu.memory_space<vmem>>, %arg3: memref<1x64xf32, #tpu.memory_space<vmem>>, %arg4: memref<32x64xbf16, #tpu.memory_space<vmem>>) attributes {dimension_semantics = [#tpu.dimension_semantics<parallel>], iteration_bounds = array<i64: 1>, scalar_prefetch = 0 : i64, scratch_operands = 0 : i64, tpu.core_type = #tpu.core_type<tc>, window_params = [{transform_indices = @transform_0, window_bounds = array<i64: 32, 512>}, {pipeline_mode = #tpu.pipeline_mode<synchronous>, transform_indices = @transform_1, window_bounds = array<i64: 512, 64>}, {pipeline_mode = #tpu.pipeline_mode<synchronous>, transform_indices = @transform_2, window_bounds = array<i64: 1, 64>}, {transform_indices = @transform_3, window_bounds = array<i64: 32, 64>}]} {
    %c0 = arith.constant 0 : index
    %c0_0 = arith.constant 0 : index
    %0 = vector.load %arg1[%c0, %c0_0] : memref<32x512xbf16, #tpu.memory_space<vmem>>, vector<32x512xbf16>
    %c0_1 = arith.constant 0 : index
    %c0_2 = arith.constant 0 : index
    %1 = vector.load %arg2[%c0_1, %c0_2] : memref<512x64xbf16, #tpu.memory_space<vmem>>, vector<512x64xbf16>
    %cst = arith.constant dense<0.000000e+00> : vector<32x64xf32>
    %2 = tpu.matmul %0, %1, %cst {dimension_numbers = #tpu.dot_dimension_numbers<[1], [0], [0], [1], [0, 0, 1, 1], [], []>} : vector<32x512xbf16>, vector<512x64xbf16>, vector<32x64xf32> -> vector<32x64xf32>
    %c0_3 = arith.constant 0 : index
    %c0_4 = arith.constant 0 : index
    %3 = vector.load %arg3[%c0_3, %c0_4] : memref<1x64xf32, #tpu.memory_space<vmem>>, vector<1x64xf32>
    %4 = vector.broadcast %3 : vector<1x64xf32> to vector<32x64xf32>
    %5 = arith.addf %2, %4 : vector<32x64xf32>
    %cst_5 = arith.constant 0.000000e+00 : f32
    %6 = vector.broadcast %cst_5 : f32 to vector<32x64xf32>
    %7 = arith.maximumf %5, %6 : vector<32x64xf32>
    %8 = arith.truncf %7 : vector<32x64xf32> to vector<32x64xbf16>
    %c0_6 = arith.constant 0 : index
    %c0_7 = arith.constant 0 : index
    %9 = vector.load %arg4[%c0_6, %c0_7] : memref<32x64xbf16, #tpu.memory_space<vmem>>, vector<32x64xbf16>
    tpu.vector_store %arg4[%c0_6, %c0_7], %8 {strides = array<i32>} : memref<32x64xbf16, #tpu.memory_space<vmem>>, vector<32x64xbf16>,
    return
  }
  func.func @transform_0(%arg0: i32) -> (i32, i32) {
    %c0_i32 = arith.constant 0 : i32
    %c0_i32_0 = arith.constant 0 : i32
    return %arg0, %c0_i32 : i32, i32
  }
  func.func @transform_1(%arg0: i32) -> (i32, i32) {
    %c0_i32 = arith.constant 0 : i32
    %c0_i32_0 = arith.constant 0 : i32
    %c0_i32_1 = arith.constant 0 : i32
    return %c0_i32, %c0_i32_0 : i32, i32
  }
  func.func @transform_2(%arg0: i32) -> (i32, i32) {
    %c0_i32 = arith.constant 0 : i32
    %c0_i32_0 = arith.constant 0 : i32
    %c0_i32_1 = arith.constant 0 : i32
    return %c0_i32, %c0_i32_0 : i32, i32
  }
  func.func @transform_3(%arg0: i32) -> (i32, i32) {
    %c0_i32 = arith.constant 0 : i32
    %c0_i32_0 = arith.constant 0 : i32
    return %arg0, %c0_i32 : i32, i32
  }
}

module attributes {stable_mosaic.version = 11 : i64} {
  func.func @_gemm_bias_act_kernel(%arg0: i32, %arg1: memref<16x640xbf16, #tpu.memory_space<vmem>>, %arg2: memref<640x64xbf16, #tpu.memory_space<vmem>>, %arg3: memref<1x64xf32, #tpu.memory_space<vmem>>, %arg4: memref<16x64xbf16, #tpu.memory_space<vmem>>) attributes {dimension_semantics = [#tpu.dimension_semantics<parallel>], iteration_bounds = array<i64: 1>, scalar_prefetch = 0 : i64, scratch_operands = 0 : i64, tpu.core_type = #tpu.core_type<tc>, window_params = [{transform_indices = @transform_0, window_bounds = array<i64: 16, 640>}, {pipeline_mode = #tpu.pipeline_mode<synchronous>, transform_indices = @transform_1, window_bounds = array<i64: 640, 64>}, {pipeline_mode = #tpu.pipeline_mode<synchronous>, transform_indices = @transform_2, window_bounds = array<i64: 1, 64>}, {transform_indices = @transform_3, window_bounds = array<i64: 16, 64>}]} {
    %c0 = arith.constant 0 : index
    %c0_0 = arith.constant 0 : index
    %0 = vector.load %arg1[%c0, %c0_0] : memref<16x640xbf16, #tpu.memory_space<vmem>>, vector<16x640xbf16>
    %c0_1 = arith.constant 0 : index
    %c0_2 = arith.constant 0 : index
    %1 = vector.load %arg2[%c0_1, %c0_2] : memref<640x64xbf16, #tpu.memory_space<vmem>>, vector<640x64xbf16>
    %cst = arith.constant dense<0.000000e+00> : vector<16x64xf32>
    %2 = tpu.matmul %0, %1, %cst {dimension_numbers = #tpu.dot_dimension_numbers<[1], [0], [0], [1], [0, 0, 1, 1], [], []>} : vector<16x640xbf16>, vector<640x64xbf16>, vector<16x64xf32> -> vector<16x64xf32>
    %c0_3 = arith.constant 0 : index
    %c0_4 = arith.constant 0 : index
    %3 = vector.load %arg3[%c0_3, %c0_4] : memref<1x64xf32, #tpu.memory_space<vmem>>, vector<1x64xf32>
    %4 = vector.broadcast %3 : vector<1x64xf32> to vector<16x64xf32>
    %5 = arith.addf %2, %4 : vector<16x64xf32>
    %cst_5 = arith.constant 0.000000e+00 : f32
    %6 = vector.broadcast %cst_5 : f32 to vector<16x64xf32>
    %7 = arith.maximumf %5, %6 : vector<16x64xf32>
    %8 = arith.truncf %7 : vector<16x64xf32> to vector<16x64xbf16>
    %c0_6 = arith.constant 0 : index
    %c0_7 = arith.constant 0 : index
    %9 = vector.load %arg4[%c0_6, %c0_7] : memref<16x64xbf16, #tpu.memory_space<vmem>>, vector<16x64xbf16>
    tpu.vector_store %arg4[%c0_6, %c0_7], %8 {strides = array<i32>} : memref<16x64xbf16, #tpu.memory_space<vmem>>, vector<16x64xbf16>,
    return
  }
  func.func @transform_0(%arg0: i32) -> (i32, i32) {
    %c0_i32 = arith.constant 0 : i32
    %c0_i32_0 = arith.constant 0 : i32
    return %arg0, %c0_i32 : i32, i32
  }
  func.func @transform_1(%arg0: i32) -> (i32, i32) {
    %c0_i32 = arith.constant 0 : i32
    %c0_i32_0 = arith.constant 0 : i32
    %c0_i32_1 = arith.constant 0 : i32
    return %c0_i32, %c0_i32_0 : i32, i32
  }
  func.func @transform_2(%arg0: i32) -> (i32, i32) {
    %c0_i32 = arith.constant 0 : i32
    %c0_i32_0 = arith.constant 0 : i32
    %c0_i32_1 = arith.constant 0 : i32
    return %c0_i32, %c0_i32_0 : i32, i32
  }
  func.func @transform_3(%arg0: i32) -> (i32, i32) {
    %c0_i32 = arith.constant 0 : i32
    %c0_i32_0 = arith.constant 0 : i32
    return %arg0, %c0_i32 : i32, i32
  }
}

module attributes {stable_mosaic.version = 11 : i64} {
  func.func @_noisy_head_kernel(%arg0: i32, %arg1: memref<16x64xbf16, #tpu.memory_space<vmem>>, %arg2: memref<64x1024xbf16, #tpu.memory_space<vmem>>, %arg3: memref<1x1024xf32, #tpu.memory_space<vmem>>, %arg4: memref<1x512xf32, #tpu.memory_space<vmem>>, %arg5: memref<1x1xf32, #tpu.memory_space<vmem>>, %arg6: memref<512x256xbf16, #tpu.memory_space<vmem>>, %arg7: memref<1x256xf32, #tpu.memory_space<vmem>>, %arg8: memref<16x128xf32, #tpu.memory_space<vmem>>) attributes {dimension_semantics = [#tpu.dimension_semantics<parallel>], iteration_bounds = array<i64: 1>, scalar_prefetch = 0 : i64, scratch_operands = 0 : i64, tpu.core_type = #tpu.core_type<tc>, window_params = [{transform_indices = @transform_0, window_bounds = array<i64: 16, 64>}, {pipeline_mode = #tpu.pipeline_mode<synchronous>, transform_indices = @transform_1, window_bounds = array<i64: 64, 1024>}, {pipeline_mode = #tpu.pipeline_mode<synchronous>, transform_indices = @transform_2, window_bounds = array<i64: 1, 1024>}, {pipeline_mode = #tpu.pipeline_mode<synchronous>, transform_indices = @transform_3, window_bounds = array<i64: 1, 512>}, {pipeline_mode = #tpu.pipeline_mode<synchronous>, transform_indices = @transform_4, window_bounds = array<i64: 1, 1>}, {pipeline_mode = #tpu.pipeline_mode<synchronous>, transform_indices = @transform_5, window_bounds = array<i64: 512, 256>}, {pipeline_mode = #tpu.pipeline_mode<synchronous>, transform_indices = @transform_6, window_bounds = array<i64: 1, 256>}, {transform_indices = @transform_7, window_bounds = array<i64: 16, 128>}]} {
    %c0 = arith.constant 0 : index
    %c0_0 = arith.constant 0 : index
    %0 = vector.load %arg1[%c0, %c0_0] : memref<16x64xbf16, #tpu.memory_space<vmem>>, vector<16x64xbf16>
    %c0_1 = arith.constant 0 : index
    %c0_2 = arith.constant 0 : index
    %1 = vector.load %arg2[%c0_1, %c0_2] : memref<64x1024xbf16, #tpu.memory_space<vmem>>, vector<64x1024xbf16>
    %cst = arith.constant dense<0.000000e+00> : vector<16x1024xf32>
    %2 = tpu.matmul %0, %1, %cst {dimension_numbers = #tpu.dot_dimension_numbers<[1], [0], [0], [1], [0, 0, 1, 1], [], []>} : vector<16x64xbf16>, vector<64x1024xbf16>, vector<16x1024xf32> -> vector<16x1024xf32>
    %c0_3 = arith.constant 0 : index
    %c0_4 = arith.constant 0 : index
    %3 = vector.load %arg3[%c0_3, %c0_4] : memref<1x1024xf32, #tpu.memory_space<vmem>>, vector<1x1024xf32>
    %4 = vector.broadcast %3 : vector<1x1024xf32> to vector<16x1024xf32>
    %5 = arith.addf %2, %4 : vector<16x1024xf32>
    %cst_5 = arith.constant 0.000000e+00 : f32
    %6 = vector.broadcast %cst_5 : f32 to vector<16x1024xf32>
    %7 = arith.maximumf %5, %6 : vector<16x1024xf32>
    %8 = vector.extract_strided_slice %7 {offsets = [0, 0], sizes = [16, 512], strides = [1, 1]} : vector<16x1024xf32> to vector<16x512xf32>
    %9 = vector.extract_strided_slice %7 {offsets = [0, 512], sizes = [16, 512], strides = [1, 1]} : vector<16x1024xf32> to vector<16x512xf32>
    %c0_6 = arith.constant 0 : index
    %c0_7 = arith.constant 0 : index
    %10 = vector.load %arg4[%c0_6, %c0_7] : memref<1x512xf32, #tpu.memory_space<vmem>>, vector<1x512xf32>
    %11 = vector.broadcast %10 : vector<1x512xf32> to vector<16x512xf32>
    %12 = arith.mulf %9, %11 : vector<16x512xf32>
    %cst_8 = arith.constant dense<0.000000e+00> : vector<16xf32>
    %13 = vector.multi_reduction <add>, %12, %cst_8 [1] : vector<16x512xf32> to vector<16xf32>
    %14 = vector.shape_cast %13 : vector<16xf32> to vector<16x1xf32>
    %c0_9 = arith.constant 0 : index
    %c0_10 = arith.constant 0 : index
    %15 = vector.load %arg5[%c0_9, %c0_10] : memref<1x1xf32, #tpu.memory_space<vmem>>, vector<1x1xf32>
    %16 = vector.broadcast %15 : vector<1x1xf32> to vector<16x1xf32>
    %17 = arith.addf %14, %16 : vector<16x1xf32>
    %18 = arith.truncf %8 : vector<16x512xf32> to vector<16x512xbf16>
    %c0_11 = arith.constant 0 : index
    %c0_12 = arith.constant 0 : index
    %19 = vector.load %arg6[%c0_11, %c0_12] : memref<512x256xbf16, #tpu.memory_space<vmem>>, vector<512x256xbf16>
    %cst_13 = arith.constant dense<0.000000e+00> : vector<16x256xf32>
    %20 = tpu.matmul %18, %19, %cst_13 {dimension_numbers = #tpu.dot_dimension_numbers<[1], [0], [0], [1], [0, 0, 1, 1], [], []>} : vector<16x512xbf16>, vector<512x256xbf16>, vector<16x256xf32> -> vector<16x256xf32>
    %c0_14 = arith.constant 0 : index
    %c0_15 = arith.constant 0 : index
    %21 = vector.load %arg7[%c0_14, %c0_15] : memref<1x256xf32, #tpu.memory_space<vmem>>, vector<1x256xf32>
    %22 = vector.broadcast %21 : vector<1x256xf32> to vector<16x256xf32>
    %23 = arith.addf %20, %22 : vector<16x256xf32>
    %24 = vector.extract_strided_slice %23 {offsets = [0, 0], sizes = [16, 128], strides = [1, 1]} : vector<16x256xf32> to vector<16x128xf32>
    %25 = vector.extract_strided_slice %23 {offsets = [0, 128], sizes = [16, 128], strides = [1, 1]} : vector<16x256xf32> to vector<16x128xf32>
    %26 = vector.broadcast %17 : vector<16x1xf32> to vector<16x128xf32>
    %27 = arith.mulf %26, %25 : vector<16x128xf32>
    %28 = arith.addf %24, %27 : vector<16x128xf32>
    %c0_16 = arith.constant 0 : index
    %c0_17 = arith.constant 0 : index
    %29 = vector.load %arg8[%c0_16, %c0_17] : memref<16x128xf32, #tpu.memory_space<vmem>>, vector<16x128xf32>
    tpu.vector_store %arg8[%c0_16, %c0_17], %28 {strides = array<i32>} : memref<16x128xf32, #tpu.memory_space<vmem>>, vector<16x128xf32>,
    return
  }
  func.func @transform_0(%arg0: i32) -> (i32, i32) {
    %c0_i32 = arith.constant 0 : i32
    %c0_i32_0 = arith.constant 0 : i32
    return %arg0, %c0_i32 : i32, i32
  }
  func.func @transform_1(%arg0: i32) -> (i32, i32) {
    %c0_i32 = arith.constant 0 : i32
    %c0_i32_0 = arith.constant 0 : i32
    %c0_i32_1 = arith.constant 0 : i32
    return %c0_i32, %c0_i32_0 : i32, i32
  }
  func.func @transform_2(%arg0: i32) -> (i32, i32) {
    %c0_i32 = arith.constant 0 : i32
    %c0_i32_0 = arith.constant 0 : i32
    %c0_i32_1 = arith.constant 0 : i32
    return %c0_i32, %c0_i32_0 : i32, i32
  }
  func.func @transform_3(%arg0: i32) -> (i32, i32) {
    %c0_i32 = arith.constant 0 : i32
    %c0_i32_0 = arith.constant 0 : i32
    %c0_i32_1 = arith.constant 0 : i32
    return %c0_i32, %c0_i32_0 : i32, i32
  }
  func.func @transform_4(%arg0: i32) -> (i32, i32) {
    %c0_i32 = arith.constant 0 : i32
    %c0_i32_0 = arith.constant 0 : i32
    %c0_i32_1 = arith.constant 0 : i32
    return %c0_i32, %c0_i32_0 : i32, i32
  }
  func.func @transform_5(%arg0: i32) -> (i32, i32) {
    %c0_i32 = arith.constant 0 : i32
    %c0_i32_0 = arith.constant 0 : i32
    %c0_i32_1 = arith.constant 0 : i32
    return %c0_i32, %c0_i32_0 : i32, i32
  }
  func.func @transform_6(%arg0: i32) -> (i32, i32) {
    %c0_i32 = arith.constant 0 : i32
    %c0_i32_0 = arith.constant 0 : i32
    %c0_i32_1 = arith.constant 0 : i32
    return %c0_i32, %c0_i32_0 : i32, i32
  }
  func.func @transform_7(%arg0: i32) -> (i32, i32) {
    %c0_i32 = arith.constant 0 : i32
    %c0_i32_0 = arith.constant 0 : i32
    return %arg0, %c0_i32 : i32, i32
  }
}

</mosaic_0001>

<llo_original>
// kernel: noisy_dqn_forward.4
$region0: #{noisy_dqn_forward.4}
  #allocation0 [shape = 'u32[]', space=smem, size = 0x4, offset = 0x4, fixed_abs, tag = 'smem constant byte address 0x4 - core index']
  #allocation1 [shape = 'u32[72,128]{1,0:T(1,128)}', space=vmem, size = 0x9000, scoped, tag = 'internal scratch']
  %s0 = inlined_call_operand.vmem [shape: bf16[128,256], index: 0, kind: input, shape index: {}]
  %s1 = inlined_call_operand.vmem [shape: bf16[256,32], index: 1, kind: input, shape index: {}]
  %s2 = inlined_call_operand.vmem [shape: f32[1,32], index: 2, kind: input, shape index: {}]
  %s3 = inlined_call_operand.vmem [shape: bf16[128,32], index: 3, kind: output, shape index: {}]
  %s4 = sld [smem:[#allocation0]]
  $region22: #{noisy_dqn_forward.4} parent=0
    _
  %s6 = ssub.s32 1, %s4
  %s7 = scalar_select 0, %s6, %s4
  // Predicated region
  $region2: #{noisy_dqn_forward.4} parent=0 // pred_check
    _
  $region3: #{noisy_dqn_forward.4} parent=0 // pred_check_branch
    %9 = sbr.rel (0) target = $region5
  $region4: #{noisy_dqn_forward.4} parent=0 // pred_region
    _
  $region5: #{noisy_dqn_forward.4} parent=0 // pred_fallthru
    _
  // Predicated region
  $region6: #{noisy_dqn_forward.4} parent=0 // pred_check
    _
  $region7: #{noisy_dqn_forward.4} parent=0 // pred_check_branch
    %11 = sbr.rel (0) target = $region9
  $region8: #{noisy_dqn_forward.4} parent=0 // pred_region
    _
  $region9: #{noisy_dqn_forward.4} parent=0 // pred_fallthru
    _
  // Predicated region
  $region10: #{noisy_dqn_forward.4} parent=0 // pred_check
    _
  $region11: #{noisy_dqn_forward.4} parent=0 // pred_check_branch
    %13 = sbr.rel (0) target = $region13
  $region12: #{noisy_dqn_forward.4} parent=0 // pred_region
    _
  $region13: #{noisy_dqn_forward.4} parent=0 // pred_fallthru
    _
  %v14 = vld [vmem:[%s0] sm:$0xff]
  %v15 = vld [vmem:[%s0 + $0x8] sm:$0xff]
  %v16 = vld [vmem:[%s0 + $0x10] sm:$0xff]
  %v17 = vld [vmem:[%s0 + $0x18] sm:$0xff]
  %v18 = vld [vmem:[%s0 + $0x20] sm:$0xff]
  %v19 = vld [vmem:[%s0 + $0x28] sm:$0xff]
  %v20 = vld [vmem:[%s0 + $0x30] sm:$0xff]
  %v21 = vld [vmem:[%s0 + $0x38] sm:$0xff]
  %v22 = vld [vmem:[%s0 + $0x40] sm:$0xff]
  %v23 = vld [vmem:[%s0 + $0x48] sm:$0xff]
  %v24 = vld [vmem:[%s0 + $0x50] sm:$0xff]
  %v25 = vld [vmem:[%s0 + $0x58] sm:$0xff]
  %v26 = vld [vmem:[%s0 + $0x60] sm:$0xff]
  %v27 = vld [vmem:[%s0 + $0x68] sm:$0xff]
  %v28 = vld [vmem:[%s0 + $0x70] sm:$0xff]
  %v29 = vld [vmem:[%s0 + $0x78] sm:$0xff]
  %v30 = vld [vmem:[%s1] sm:$0xf]
  %v31 = vld [vmem:[%s1 + $0x4] sm:$0xf]
  %v32 = vld [vmem:[%s1 + $0x8] sm:$0xf]
  %v33 = vld [vmem:[%s1 + $0xc] sm:$0xf]
  %v34 = vld [vmem:[%s1 + $0x10] sm:$0xf]
  %v35 = vld [vmem:[%s1 + $0x14] sm:$0xf]
  %v36 = vld [vmem:[%s1 + $0x18] sm:$0xf]
  %v37 = vld [vmem:[%s1 + $0x1c] sm:$0xf]
  %v38 = vld [vmem:[%s1 + $0x20] sm:$0xf]
  %v39 = vld [vmem:[%s1 + $0x24] sm:$0xf]
  %v40 = vld [vmem:[%s1 + $0x28] sm:$0xf]
  %v41 = vld [vmem:[%s1 + $0x2c] sm:$0xf]
  %v42 = vld [vmem:[%s1 + $0x30] sm:$0xf]
  %v43 = vld [vmem:[%s1 + $0x34] sm:$0xf]
  %v44 = vld [vmem:[%s1 + $0x38] sm:$0xf]
  %v45 = vld [vmem:[%s1 + $0x3c] sm:$0xf]
  %v46 = vld [vmem:[%s1 + $0x40] sm:$0xf]
  %v47 = vld [vmem:[%s1 + $0x44] sm:$0xf]
  %v48 = vld [vmem:[%s1 + $0x48] sm:$0xf]
  %v49 = vld [vmem:[%s1 + $0x4c] sm:$0xf]
  %v50 = vld [vmem:[%s1 + $0x50] sm:$0xf]
  %v51 = vld [vmem:[%s1 + $0x54] sm:$0xf]
  %v52 = vld [vmem:[%s1 + $0x58] sm:$0xf]
  %v53 = vld [vmem:[%s1 + $0x5c] sm:$0xf]
  %v54 = vld [vmem:[%s1 + $0x60] sm:$0xf]
  %v55 = vld [vmem:[%s1 + $0x64] sm:$0xf]
  %v56 = vld [vmem:[%s1 + $0x68] sm:$0xf]
  %v57 = vld [vmem:[%s1 + $0x6c] sm:$0xf]
  %v58 = vld [vmem:[%s1 + $0x70] sm:$0xf]
  %v59 = vld [vmem:[%s1 + $0x74] sm:$0xf]
  %v60 = vld [vmem:[%s1 + $0x78] sm:$0xf]
  %v61 = vld [vmem:[%s1 + $0x7c] sm:$0xf]
  %v62 = vld [vmem:[%s2] sm:$0x1]
  %v64 = vperm.slane %v62, 0
  %v82 = vunpack.c.l.b16 %v14
  %v83 = vunpack.c.h.b16 %v14
  %v84 = vunpack.c.l.b16 %v15
  %v85 = vunpack.c.h.b16 %v15
  %v86 = vunpack.c.l.b16 %v16
  %v87 = vunpack.c.h.b16 %v16
  %v88 = vunpack.c.l.b16 %v17
  %v89 = vunpack.c.h.b16 %v17
  %v90 = vunpack.c.l.b16 %v18
  %v91 = vunpack.c.h.b16 %v18
  %v92 = vunpack.c.l.b16 %v19
  %v93 = vunpack.c.h.b16 %v19
  %v94 = vunpack.c.l.b16 %v20
  %v95 = vunpack.c.h.b16 %v20
  %v96 = vunpack.c.l.b16 %v21
  %v97 = vunpack.c.h.b16 %v21
  %v98 = vunpack.c.l.b16 %v22
  %v99 = vunpack.c.h.b16 %v22
  %v100 = vunpack.c.l.b16 %v23
  %v101 = vunpack.c.h.b16 %v23
  %v102 = vunpack.c.l.b16 %v24
  %v103 = vunpack.c.h.b16 %v24
  %v104 = vunpack.c.l.b16 %v25
  %v105 = vunpack.c.h.b16 %v25
  %v106 = vunpack.c.l.b16 %v26
  %v107 = vunpack.c.h.b16 %v26
  %v108 = vunpack.c.l.b16 %v27
  %v109 = vunpack.c.h.b16 %v27
  %v110 = vunpack.c.l.b16 %v28
  %v111 = vunpack.c.h.b16 %v28
  %v112 = vunpack.c.l.b16 %v29
  %v113 = vunpack.c.h.b16 %v29
  %v114 = vpack.c.b16 %v84, %v82
  %v115 = vpack.c.b16 %v85, %v83
  %v116 = vpack.c.b16 %v88, %v86
  %v117 = vpack.c.b16 %v89, %v87
  %v118 = vpack.c.b16 %v92, %v90
  %v119 = vpack.c.b16 %v93, %v91
  %v120 = vpack.c.b16 %v96, %v94
  %v121 = vpack.c.b16 %v97, %v95
  %v122 = vpack.c.b16 %v100, %v98
  %v123 = vpack.c.b16 %v101, %v99
  %v124 = vpack.c.b16 %v104, %v102
  %v125 = vpack.c.b16 %v105, %v103
  %v126 = vpack.c.b16 %v108, %v106
  %v127 = vpack.c.b16 %v109, %v107
  %v128 = vpack.c.b16 %v112, %v110
  %v129 = vpack.c.b16 %v113, %v111
  %v178 = vunpack.c.l.b16 %v30
  %v179 = vunpack.c.l.b16 %v31
  %v180 = vunpack.c.l.b16 %v32
  %v181 = vunpack.c.l.b16 %v33
  %v182 = vunpack.c.l.b16 %v34
  %v183 = vunpack.c.l.b16 %v35
  %v184 = vunpack.c.l.b16 %v36
  %v185 = vunpack.c.l.b16 %v37
  %v186 = vunpack.c.l.b16 %v38
  %v187 = vunpack.c.l.b16 %v39
  %v188 = vunpack.c.l.b16 %v40
  %v189 = vunpack.c.l.b16 %v41
  %v190 = vunpack.c.l.b16 %v42
  %v191 = vunpack.c.l.b16 %v43
  %v192 = vunpack.c.l.b16 %v44
  %v193 = vunpack.c.l.b16 %v45
  %v194 = vunpack.c.l.b16 %v46
  %v195 = vunpack.c.l.b16 %v47
  %v196 = vunpack.c.l.b16 %v48
  %v197 = vunpack.c.l.b16 %v49
  %v198 = vunpack.c.l.b16 %v50
  %v199 = vunpack.c.l.b16 %v51
  %v200 = vunpack.c.l.b16 %v52
  %v201 = vunpack.c.l.b16 %v53
  %v202 = vunpack.c.l.b16 %v54
  %v203 = vunpack.c.l.b16 %v55
  %v204 = vunpack.c.l.b16 %v56
  %v205 = vunpack.c.l.b16 %v57
  %v206 = vunpack.c.l.b16 %v58
  %v207 = vunpack.c.l.b16 %v59
  %v208 = vunpack.c.l.b16 %v60
  %v209 = vunpack.c.l.b16 %v61
  %v210 = vpack.c.b16 %v179, %v178
  %v211 = vpack.c.b16 %v181, %v180
  %v212 = vpack.c.b16 %v183, %v182
  %v213 = vpack.c.b16 %v185, %v184
  %v214 = vpack.c.b16 %v187, %v186
  %v215 = vpack.c.b16 %v189, %v188
  %v216 = vpack.c.b16 %v191, %v190
  %v217 = vpack.c.b16 %v193, %v192
  %v218 = vpack.c.b16 %v195, %v194
  %v219 = vpack.c.b16 %v197, %v196
  %v220 = vpack.c.b16 %v199, %v198
  %v221 = vpack.c.b16 %v201, %v200
  %v222 = vpack.c.b16 %v203, %v202
  %v223 = vpack.c.b16 %v205, %v204
  %v224 = vpack.c.b16 %v207, %v206
  %v225 = vpack.c.b16 %v209, %v208
  %242 = vmatpush.bf16.msra.mxu0 %v217
  %243 = vmatpush.bf16.msra.mxu0 %v216
  %244 = vmatpush.bf16.msra.mxu0 %v215
  %245 = vmatpush.bf16.msra.mxu0 %v214
  %246 = vmatpush.bf16.msra.mxu0 %v213
  %247 = vmatpush.bf16.msra.mxu0 %v212
  %248 = vmatpush.bf16.msra.mxu0 %v211
  %249 = vmatpush.bf16.msra.mxu0 %v210
  %250 = vmatmul.bf16.gmra.mxu0 %v114
  %v251 = vpop.f32.mrf.mxu0
  %v252 = vadd.f32 %v64, %v251
  %v253 = vpop.f32.mrf.mxu0
  %v254 = vadd.f32 %v64, %v253
  %255 = vmatmul.bf16.gmra.mxu0 %v116
  %v256 = vpop.f32.mrf.mxu0
  %v257 = vadd.f32 %v64, %v256
  %v258 = vpop.f32.mrf.mxu0
  %v259 = vadd.f32 %v64, %v258
  %260 = vmatmul.bf16.gmra.mxu0 %v118
  %v261 = vpop.f32.mrf.mxu0
  %v262 = vadd.f32 %v64, %v261
  %v263 = vpop.f32.mrf.mxu0
  %v264 = vadd.f32 %v64, %v263
  %265 = vmatmul.bf16.gmra.mxu0 %v120
  %v266 = vpop.f32.mrf.mxu0
  %v267 = vadd.f32 %v64, %v266
  %v268 = vpop.f32.mrf.mxu0
  %v269 = vadd.f32 %v64, %v268
  %270 = vmatmul.bf16.gmra.mxu0 %v122
  %v271 = vpop.f32.mrf.mxu0
  %v272 = vadd.f32 %v64, %v271
  %v273 = vpop.f32.mrf.mxu0
  %v274 = vadd.f32 %v64, %v273
  %275 = vmatmul.bf16.gmra.mxu0 %v124
  %v276 = vpop.f32.mrf.mxu0
  %v277 = vadd.f32 %v64, %v276
  %v278 = vpop.f32.mrf.mxu0
  %v279 = vadd.f32 %v64, %v278
  %280 = vmatmul.bf16.gmra.mxu0 %v126
  %v281 = vpop.f32.mrf.mxu0
  %v282 = vadd.f32 %v64, %v281
  %v283 = vpop.f32.mrf.mxu0
  %v284 = vadd.f32 %v64, %v283
  %285 = vmatmul.bf16.gmra.mxu0 %v128
  %v286 = vpop.f32.mrf.mxu0
  %v287 = vadd.f32 %v64, %v286
  %v288 = vpop.f32.mrf.mxu0
  %v289 = vadd.f32 %v64, %v288
  %290 = vdwg.mxu0
  %291 = vmatpush.bf16.msra.mxu0 %v225
  %292 = vmatpush.bf16.msra.mxu0 %v224
  %293 = vmatpush.bf16.msra.mxu0 %v223
  %294 = vmatpush.bf16.msra.mxu0 %v222
  %295 = vmatpush.bf16.msra.mxu0 %v221
  %296 = vmatpush.bf16.msra.mxu0 %v220
  %297 = vmatpush.bf16.msra.mxu0 %v219
  %298 = vmatpush.bf16.msra.mxu0 %v218
  %299 = vmatmul.bf16.gmra.mxu0 %v115
  %v300 = vpop.f32.mrf.mxu0
  %v301 = vadd.f32 %v252, %v300
  %v302 = vpop.f32.mrf.mxu0
  %v303 = vadd.f32 %v254, %v302
  %304 = vmatmul.bf16.gmra.mxu0 %v117
  %v305 = vpop.f32.mrf.mxu0
  %v306 = vadd.f32 %v257, %v305
  %v307 = vpop.f32.mrf.mxu0
  %v308 = vadd.f32 %v259, %v307
  %309 = vmatmul.bf16.gmra.mxu0 %v119
  %v310 = vpop.f32.mrf.mxu0
  %v311 = vadd.f32 %v262, %v310
  %v312 = vpop.f32.mrf.mxu0
  %v313 = vadd.f32 %v264, %v312
  %314 = vmatmul.bf16.gmra.mxu0 %v121
  %v315 = vpop.f32.mrf.mxu0
  %v316 = vadd.f32 %v267, %v315
  %v317 = vpop.f32.mrf.mxu0
  %v318 = vadd.f32 %v269, %v317
  %319 = vmatmul.bf16.gmra.mxu0 %v123
  %v320 = vpop.f32.mrf.mxu0
  %v321 = vadd.f32 %v272, %v320
  %v322 = vpop.f32.mrf.mxu0
  %v323 = vadd.f32 %v274, %v322
  %324 = vmatmul.bf16.gmra.mxu0 %v125
  %v325 = vpop.f32.mrf.mxu0
  %v326 = vadd.f32 %v277, %v325
  %v327 = vpop.f32.mrf.mxu0
  %v328 = vadd.f32 %v279, %v327
  %329 = vmatmul.bf16.gmra.mxu0 %v127
  %v330 = vpop.f32.mrf.mxu0
  %v331 = vadd.f32 %v282, %v330
  %v332 = vpop.f32.mrf.mxu0
  %v333 = vadd.f32 %v284, %v332
  %334 = vmatmul.bf16.gmra.mxu0 %v129
  %v335 = vpop.f32.mrf.mxu0
  %v336 = vadd.f32 %v287, %v335
  %v337 = vpop.f32.mrf.mxu0
  %v338 = vadd.f32 %v289, %v337
  %339 = vdwg.mxu0
  %v340 = vmax.f32 %v301, 0.0
  %v341 = vmax.f32 %v303, 0.0
  %v342 = vmax.f32 %v306, 0.0
  %v343 = vmax.f32 %v308, 0.0
  %v344 = vmax.f32 %v311, 0.0
  %v345 = vmax.f32 %v313, 0.0
  %v346 = vmax.f32 %v316, 0.0
  %v347 = vmax.f32 %v318, 0.0
  %v348 = vmax.f32 %v321, 0.0
  %v349 = vmax.f32 %v323, 0.0
  %v350 = vmax.f32 %v326, 0.0
  %v351 = vmax.f32 %v328, 0.0
  %v352 = vmax.f32 %v331, 0.0
  %v353 = vmax.f32 %v333, 0.0
  %v354 = vmax.f32 %v336, 0.0
  %v355 = vmax.f32 %v338, 0.0
  %v356 = vpack.c.bf16 %v340, %v340
  %v357 = vpack.c.bf16 %v341, %v341
  %v358 = vpack.c.bf16 %v342, %v342
  %v359 = vpack.c.bf16 %v343, %v343
  %v360 = vpack.c.bf16 %v344, %v344
  %v361 = vpack.c.bf16 %v345, %v345
  %v362 = vpack.c.bf16 %v346, %v346
  %v363 = vpack.c.bf16 %v347, %v347
  %v364 = vpack.c.bf16 %v348, %v348
  %v365 = vpack.c.bf16 %v349, %v349
  %v366 = vpack.c.bf16 %v350, %v350
  %v367 = vpack.c.bf16 %v351, %v351
  %v368 = vpack.c.bf16 %v352, %v352
  %v369 = vpack.c.bf16 %v353, %v353
  %v370 = vpack.c.bf16 %v354, %v354
  %v371 = vpack.c.bf16 %v355, %v355
  %vm372 = vcmask 257024
  %373 = vst.msk [vmem:[%s3] sm:$0xf] %vm372, %v356
  %374 = vst.msk [vmem:[%s3 + $0x4] sm:$0xf] %vm372, %v357
  %375 = vst.msk [vmem:[%s3 + $0x8] sm:$0xf] %vm372, %v358
  %376 = vst.msk [vmem:[%s3 + $0xc] sm:$0xf] %vm372, %v359
  %377 = vst.msk [vmem:[%s3 + $0x10] sm:$0xf] %vm372, %v360
  %378 = vst.msk [vmem:[%s3 + $0x14] sm:$0xf] %vm372, %v361
  %379 = vst.msk [vmem:[%s3 + $0x18] sm:$0xf] %vm372, %v362
  %380 = vst.msk [vmem:[%s3 + $0x1c] sm:$0xf] %vm372, %v363
  %381 = vst.msk [vmem:[%s3 + $0x20] sm:$0xf] %vm372, %v364
  %382 = vst.msk [vmem:[%s3 + $0x24] sm:$0xf] %vm372, %v365
  %383 = vst.msk [vmem:[%s3 + $0x28] sm:$0xf] %vm372, %v366
  %384 = vst.msk [vmem:[%s3 + $0x2c] sm:$0xf] %vm372, %v367
  %385 = vst.msk [vmem:[%s3 + $0x30] sm:$0xf] %vm372, %v368
  %386 = vst.msk [vmem:[%s3 + $0x34] sm:$0xf] %vm372, %v369
  %387 = vst.msk [vmem:[%s3 + $0x38] sm:$0xf] %vm372, %v370
  %388 = vst.msk [vmem:[%s3 + $0x3c] sm:$0xf] %vm372, %v371
  // Predicated region
  $region14: #{noisy_dqn_forward.4} parent=0 // pred_check
    _
  $region15: #{noisy_dqn_forward.4} parent=0 // pred_check_branch
    %390 = sbr.rel (0) target = $region17
  $region16: #{noisy_dqn_forward.4} parent=0 // pred_region
    _
  $region17: #{noisy_dqn_forward.4} parent=0 // pred_fallthru
    _
  // Predicated region
  $region18: #{noisy_dqn_forward.4} parent=0 // pred_check
    _
  $region19: #{noisy_dqn_forward.4} parent=0 // pred_check_branch
    %392 = sbr.rel (0) target = $region21
  $region20: #{noisy_dqn_forward.4} parent=0 // pred_region
    _
  $region21: #{noisy_dqn_forward.4} parent=0 // pred_fallthru
    _

// kernel: noisy_dqn_forward.5
$region0: #{noisy_dqn_forward.5}
  #allocation0 [shape = 'u32[]', space=smem, size = 0x4, offset = 0x4, fixed_abs, tag = 'smem constant byte address 0x4 - core index']
  #allocation1 [shape = 'u32[72,128]{1,0:T(1,128)}', space=vmem, size = 0x9000, scoped, tag = 'internal scratch']
  %s0 = inlined_call_operand.vmem [shape: bf16[32,512], index: 0, kind: input, shape index: {}]
  %s1 = inlined_call_operand.vmem [shape: bf16[512,64], index: 1, kind: input, shape index: {}]
  %s2 = inlined_call_operand.vmem [shape: f32[1,64], index: 2, kind: input, shape index: {}]
  %s3 = inlined_call_operand.vmem [shape: bf16[32,64], index: 3, kind: output, shape index: {}]
  %s4 = sld [smem:[#allocation0]]
  $region22: #{noisy_dqn_forward.5} parent=0
    _
  %s6 = ssub.s32 1, %s4
  %s7 = scalar_select 0, %s6, %s4
  // Predicated region
  $region2: #{noisy_dqn_forward.5} parent=0 // pred_check
    _
  $region3: #{noisy_dqn_forward.5} parent=0 // pred_check_branch
    %9 = sbr.rel (0) target = $region5
  $region4: #{noisy_dqn_forward.5} parent=0 // pred_region
    _
  $region5: #{noisy_dqn_forward.5} parent=0 // pred_fallthru
    _
  // Predicated region
  $region6: #{noisy_dqn_forward.5} parent=0 // pred_check
    _
  $region7: #{noisy_dqn_forward.5} parent=0 // pred_check_branch
    %11 = sbr.rel (0) target = $region9
  $region8: #{noisy_dqn_forward.5} parent=0 // pred_region
    _
  $region9: #{noisy_dqn_forward.5} parent=0 // pred_fallthru
    _
  // Predicated region
  $region10: #{noisy_dqn_forward.5} parent=0 // pred_check
    _
  $region11: #{noisy_dqn_forward.5} parent=0 // pred_check_branch
    %13 = sbr.rel (0) target = $region13
  $region12: #{noisy_dqn_forward.5} parent=0 // pred_region
    _
  $region13: #{noisy_dqn_forward.5} parent=0 // pred_fallthru
    _
  %v14 = vld [vmem:[%s0] sm:$0xff]
  %v15 = vld [vmem:[%s0 + $0x8] sm:$0xff]
  %v16 = vld [vmem:[%s0 + $0x10] sm:$0xff]
  %v17 = vld [vmem:[%s0 + $0x18] sm:$0xff]
  %v18 = vld [vmem:[%s0 + $0x20] sm:$0xff]
  %v19 = vld [vmem:[%s0 + $0x28] sm:$0xff]
  %v20 = vld [vmem:[%s0 + $0x30] sm:$0xff]
  %v21 = vld [vmem:[%s0 + $0x38] sm:$0xff]
  %v22 = vld [vmem:[%s1] sm:$0xf]
  %v23 = vld [vmem:[%s1 + $0x4] sm:$0xf]
  %v24 = vld [vmem:[%s1 + $0x8] sm:$0xf]
  %v25 = vld [vmem:[%s1 + $0xc] sm:$0xf]
  %v26 = vld [vmem:[%s1 + $0x10] sm:$0xf]
  %v27 = vld [vmem:[%s1 + $0x14] sm:$0xf]
  %v28 = vld [vmem:[%s1 + $0x18] sm:$0xf]
  %v29 = vld [vmem:[%s1 + $0x1c] sm:$0xf]
  %v30 = vld [vmem:[%s1 + $0x20] sm:$0xf]
  %v31 = vld [vmem:[%s1 + $0x24] sm:$0xf]
  %v32 = vld [vmem:[%s1 + $0x28] sm:$0xf]
  %v33 = vld [vmem:[%s1 + $0x2c] sm:$0xf]
  %v34 = vld [vmem:[%s1 + $0x30] sm:$0xf]
  %v35 = vld [vmem:[%s1 + $0x34] sm:$0xf]
  %v36 = vld [vmem:[%s1 + $0x38] sm:$0xf]
  %v37 = vld [vmem:[%s1 + $0x3c] sm:$0xf]
  %v38 = vld [vmem:[%s1 + $0x40] sm:$0xf]
  %v39 = vld [vmem:[%s1 + $0x44] sm:$0xf]
  %v40 = vld [vmem:[%s1 + $0x48] sm:$0xf]
  %v41 = vld [vmem:[%s1 + $0x4c] sm:$0xf]
  %v42 = vld [vmem:[%s1 + $0x50] sm:$0xf]
  %v43 = vld [vmem:[%s1 + $0x54] sm:$0xf]
  %v44 = vld [vmem:[%s1 + $0x58] sm:$0xf]
  %v45 = vld [vmem:[%s1 + $0x5c] sm:$0xf]
  %v46 = vld [vmem:[%s1 + $0x60] sm:$0xf]
  %v47 = vld [vmem:[%s1 + $0x64] sm:$0xf]
  %v48 = vld [vmem:[%s1 + $0x68] sm:$0xf]
  %v49 = vld [vmem:[%s1 + $0x6c] sm:$0xf]
  %v50 = vld [vmem:[%s1 + $0x70] sm:$0xf]
  %v51 = vld [vmem:[%s1 + $0x74] sm:$0xf]
  %v52 = vld [vmem:[%s1 + $0x78] sm:$0xf]
  %v53 = vld [vmem:[%s1 + $0x7c] sm:$0xf]
  %v54 = vld [vmem:[%s1 + $0x80] sm:$0xf]
  %v55 = vld [vmem:[%s1 + $0x84] sm:$0xf]
  %v56 = vld [vmem:[%s1 + $0x88] sm:$0xf]
  %v57 = vld [vmem:[%s1 + $0x8c] sm:$0xf]
  %v58 = vld [vmem:[%s1 + $0x90] sm:$0xf]
  %v59 = vld [vmem:[%s1 + $0x94] sm:$0xf]
  %v60 = vld [vmem:[%s1 + $0x98] sm:$0xf]
  %v61 = vld [vmem:[%s1 + $0x9c] sm:$0xf]
  %v62 = vld [vmem:[%s1 + $0xa0] sm:$0xf]
  %v63 = vld [vmem:[%s1 + $0xa4] sm:$0xf]
  %v64 = vld [vmem:[%s1 + $0xa8] sm:$0xf]
  %v65 = vld [vmem:[%s1 + $0xac] sm:$0xf]
  %v66 = vld [vmem:[%s1 + $0xb0] sm:$0xf]
  %v67 = vld [vmem:[%s1 + $0xb4] sm:$0xf]
  %v68 = vld [vmem:[%s1 + $0xb8] sm:$0xf]
  %v69 = vld [vmem:[%s1 + $0xbc] sm:$0xf]
  %v70 = vld [vmem:[%s1 + $0xc0] sm:$0xf]
  %v71 = vld [vmem:[%s1 + $0xc4] sm:$0xf]
  %v72 = vld [vmem:[%s1 + $0xc8] sm:$0xf]
  %v73 = vld [vmem:[%s1 + $0xcc] sm:$0xf]
  %v74 = vld [vmem:[%s1 + $0xd0] sm:$0xf]
  %v75 = vld [vmem:[%s1 + $0xd4] sm:$0xf]
  %v76 = vld [vmem:[%s1 + $0xd8] sm:$0xf]
  %v77 = vld [vmem:[%s1 + $0xdc] sm:$0xf]
  %v78 = vld [vmem:[%s1 + $0xe0] sm:$0xf]
  %v79 = vld [vmem:[%s1 + $0xe4] sm:$0xf]
  %v80 = vld [vmem:[%s1 + $0xe8] sm:$0xf]
  %v81 = vld [vmem:[%s1 + $0xec] sm:$0xf]
  %v82 = vld [vmem:[%s1 + $0xf0] sm:$0xf]
  %v83 = vld [vmem:[%s1 + $0xf4] sm:$0xf]
  %v84 = vld [vmem:[%s1 + $0xf8] sm:$0xf]
  %v85 = vld [vmem:[%s1 + $0xfc] sm:$0xf]
  %v86 = vld [vmem:[%s2] sm:$0x1]
  %v88 = vperm.slane %v86, 0
  %v98 = vunpack.c.l.b16 %v14
  %v99 = vunpack.c.h.b16 %v14
  %v100 = vunpack.c.l.b16 %v15
  %v101 = vunpack.c.h.b16 %v15
  %v102 = vunpack.c.l.b16 %v16
  %v103 = vunpack.c.h.b16 %v16
  %v104 = vunpack.c.l.b16 %v17
  %v105 = vunpack.c.h.b16 %v17
  %v106 = vunpack.c.l.b16 %v18
  %v107 = vunpack.c.h.b16 %v18
  %v108 = vunpack.c.l.b16 %v19
  %v109 = vunpack.c.h.b16 %v19
  %v110 = vunpack.c.l.b16 %v20
  %v111 = vunpack.c.h.b16 %v20
  %v112 = vunpack.c.l.b16 %v21
  %v113 = vunpack.c.h.b16 %v21
  %v114 = vpack.c.b16 %v102, %v98
  %v115 = vpack.c.b16 %v103, %v99
  %v116 = vpack.c.b16 %v104, %v100
  %v117 = vpack.c.b16 %v105, %v101
  %v118 = vpack.c.b16 %v110, %v106
  %v119 = vpack.c.b16 %v111, %v107
  %v120 = vpack.c.b16 %v112, %v108
  %v121 = vpack.c.b16 %v113, %v109
  %v194 = vunpack.c.l.b16 %v22
  %v195 = vunpack.c.l.b16 %v23
  %v196 = vunpack.c.l.b16 %v24
  %v197 = vunpack.c.l.b16 %v25
  %v198 = vunpack.c.l.b16 %v26
  %v199 = vunpack.c.l.b16 %v27
  %v200 = vunpack.c.l.b16 %v28
  %v201 = vunpack.c.l.b16 %v29
  %v202 = vunpack.c.l.b16 %v30
  %v203 = vunpack.c.l.b16 %v31
  %v204 = vunpack.c.l.b16 %v32
  %v205 = vunpack.c.l.b16 %v33
  %v206 = vunpack.c.l.b16 %v34
  %v207 = vunpack.c.l.b16 %v35
  %v208 = vunpack.c.l.b16 %v36
  %v209 = vunpack.c.l.b16 %v37
  %v210 = vunpack.c.l.b16 %v38
  %v211 = vunpack.c.l.b16 %v39
  %v212 = vunpack.c.l.b16 %v40
  %v213 = vunpack.c.l.b16 %v41
  %v214 = vunpack.c.l.b16 %v42
  %v215 = vunpack.c.l.b16 %v43
  %v216 = vunpack.c.l.b16 %v44
  %v217 = vunpack.c.l.b16 %v45
  %v218 = vunpack.c.l.b16 %v46
  %v219 = vunpack.c.l.b16 %v47
  %v220 = vunpack.c.l.b16 %v48
  %v221 = vunpack.c.l.b16 %v49
  %v222 = vunpack.c.l.b16 %v50
  %v223 = vunpack.c.l.b16 %v51
  %v224 = vunpack.c.l.b16 %v52
  %v225 = vunpack.c.l.b16 %v53
  %v226 = vunpack.c.l.b16 %v54
  %v227 = vunpack.c.l.b16 %v55
  %v228 = vunpack.c.l.b16 %v56
  %v229 = vunpack.c.l.b16 %v57
  %v230 = vunpack.c.l.b16 %v58
  %v231 = vunpack.c.l.b16 %v59
  %v232 = vunpack.c.l.b16 %v60
  %v233 = vunpack.c.l.b16 %v61
  %v234 = vunpack.c.l.b16 %v62
  %v235 = vunpack.c.l.b16 %v63
  %v236 = vunpack.c.l.b16 %v64
  %v237 = vunpack.c.l.b16 %v65
  %v238 = vunpack.c.l.b16 %v66
  %v239 = vunpack.c.l.b16 %v67
  %v240 = vunpack.c.l.b16 %v68
  %v241 = vunpack.c.l.b16 %v69
  %v242 = vunpack.c.l.b16 %v70
  %v243 = vunpack.c.l.b16 %v71
  %v244 = vunpack.c.l.b16 %v72
  %v245 = vunpack.c.l.b16 %v73
  %v246 = vunpack.c.l.b16 %v74
  %v247 = vunpack.c.l.b16 %v75
  %v248 = vunpack.c.l.b16 %v76
  %v249 = vunpack.c.l.b16 %v77
  %v250 = vunpack.c.l.b16 %v78
  %v251 = vunpack.c.l.b16 %v79
  %v252 = vunpack.c.l.b16 %v80
  %v253 = vunpack.c.l.b16 %v81
  %v254 = vunpack.c.l.b16 %v82
  %v255 = vunpack.c.l.b16 %v83
  %v256 = vunpack.c.l.b16 %v84
  %v257 = vunpack.c.l.b16 %v85
  %v258 = vpack.c.b16 %v195, %v194
  %v259 = vpack.c.b16 %v197, %v196
  %v260 = vpack.c.b16 %v199, %v198
  %v261 = vpack.c.b16 %v201, %v200
  %v262 = vpack.c.b16 %v203, %v202
  %v263 = vpack.c.b16 %v205, %v204
  %v264 = vpack.c.b16 %v207, %v206
  %v265 = vpack.c.b16 %v209, %v208
  %v266 = vpack.c.b16 %v211, %v210
  %v267 = vpack.c.b16 %v213, %v212
  %v268 = vpack.c.b16 %v215, %v214
  %v269 = vpack.c.b16 %v217, %v216
  %v270 = vpack.c.b16 %v219, %v218
  %v271 = vpack.c.b16 %v221, %v220
  %v272 = vpack.c.b16 %v223, %v222
  %v273 = vpack.c.b16 %v225, %v224
  %v274 = vpack.c.b16 %v227, %v226
  %v275 = vpack.c.b16 %v229, %v228
  %v276 = vpack.c.b16 %v231, %v230
  %v277 = vpack.c.b16 %v233, %v232
  %v278 = vpack.c.b16 %v235, %v234
  %v279 = vpack.c.b16 %v237, %v236
  %v280 = vpack.c.b16 %v239, %v238
  %v281 = vpack.c.b16 %v241, %v240
  %v282 = vpack.c.b16 %v243, %v242
  %v283 = vpack.c.b16 %v245, %v244
  %v284 = vpack.c.b16 %v247, %v246
  %v285 = vpack.c.b16 %v249, %v248
  %v286 = vpack.c.b16 %v251, %v250
  %v287 = vpack.c.b16 %v253, %v252
  %v288 = vpack.c.b16 %v255, %v254
  %v289 = vpack.c.b16 %v257, %v256
  %322 = vmatpush.bf16.msra.mxu0 %v265
  %323 = vmatpush.bf16.msra.mxu0 %v264
  %324 = vmatpush.bf16.msra.mxu0 %v263
  %325 = vmatpush.bf16.msra.mxu0 %v262
  %326 = vmatpush.bf16.msra.mxu0 %v261
  %327 = vmatpush.bf16.msra.mxu0 %v260
  %328 = vmatpush.bf16.msra.mxu0 %v259
  %329 = vmatpush.bf16.msra.mxu0 %v258
  %330 = vmatmul.bf16.gmra.mxu0 %v114
  %v331 = vpop.f32.mrf.mxu0
  %v332 = vadd.f32 %v88, %v331
  %v333 = vpop.f32.mrf.mxu0
  %v334 = vadd.f32 %v88, %v333
  %335 = vmatmul.bf16.gmra.mxu0 %v118
  %v336 = vpop.f32.mrf.mxu0
  %v337 = vadd.f32 %v88, %v336
  %v338 = vpop.f32.mrf.mxu0
  %v339 = vadd.f32 %v88, %v338
  %340 = vdwg.mxu0
  %341 = vmatpush.bf16.msra.mxu0 %v273
  %342 = vmatpush.bf16.msra.mxu0 %v272
  %343 = vmatpush.bf16.msra.mxu0 %v271
  %344 = vmatpush.bf16.msra.mxu0 %v270
  %345 = vmatpush.bf16.msra.mxu0 %v269
  %346 = vmatpush.bf16.msra.mxu0 %v268
  %347 = vmatpush.bf16.msra.mxu0 %v267
  %348 = vmatpush.bf16.msra.mxu0 %v266
  %349 = vmatmul.bf16.gmra.mxu0 %v115
  %v350 = vpop.f32.mrf.mxu0
  %v351 = vadd.f32 %v332, %v350
  %v352 = vpop.f32.mrf.mxu0
  %v353 = vadd.f32 %v334, %v352
  %354 = vmatmul.bf16.gmra.mxu0 %v119
  %v355 = vpop.f32.mrf.mxu0
  %v356 = vadd.f32 %v337, %v355
  %v357 = vpop.f32.mrf.mxu0
  %v358 = vadd.f32 %v339, %v357
  %359 = vdwg.mxu0
  %360 = vmatpush.bf16.msra.mxu0 %v281
  %361 = vmatpush.bf16.msra.mxu0 %v280
  %362 = vmatpush.bf16.msra.mxu0 %v279
  %363 = vmatpush.bf16.msra.mxu0 %v278
  %364 = vmatpush.bf16.msra.mxu0 %v277
  %365 = vmatpush.bf16.msra.mxu0 %v276
  %366 = vmatpush.bf16.msra.mxu0 %v275
  %367 = vmatpush.bf16.msra.mxu0 %v274
  %368 = vmatmul.bf16.gmra.mxu0 %v116
  %v369 = vpop.f32.mrf.mxu0
  %v370 = vadd.f32 %v351, %v369
  %v371 = vpop.f32.mrf.mxu0
  %v372 = vadd.f32 %v353, %v371
  %373 = vmatmul.bf16.gmra.mxu0 %v120
  %v374 = vpop.f32.mrf.mxu0
  %v375 = vadd.f32 %v356, %v374
  %v376 = vpop.f32.mrf.mxu0
  %v377 = vadd.f32 %v358, %v376
  %378 = vdwg.mxu0
  %379 = vmatpush.bf16.msra.mxu0 %v289
  %380 = vmatpush.bf16.msra.mxu0 %v288
  %381 = vmatpush.bf16.msra.mxu0 %v287
  %382 = vmatpush.bf16.msra.mxu0 %v286
  %383 = vmatpush.bf16.msra.mxu0 %v285
  %384 = vmatpush.bf16.msra.mxu0 %v284
  %385 = vmatpush.bf16.msra.mxu0 %v283
  %386 = vmatpush.bf16.msra.mxu0 %v282
  %387 = vmatmul.bf16.gmra.mxu0 %v117
  %v388 = vpop.f32.mrf.mxu0
  %v389 = vadd.f32 %v370, %v388
  %v390 = vpop.f32.mrf.mxu0
  %v391 = vadd.f32 %v372, %v390
  %392 = vmatmul.bf16.gmra.mxu0 %v121
  %v393 = vpop.f32.mrf.mxu0
  %v394 = vadd.f32 %v375, %v393
  %v395 = vpop.f32.mrf.mxu0
  %v396 = vadd.f32 %v377, %v395
  %397 = vdwg.mxu0
  %v398 = vmax.f32 %v389, 0.0
  %v399 = vmax.f32 %v391, 0.0
  %v400 = vmax.f32 %v394, 0.0
  %v401 = vmax.f32 %v396, 0.0
  %v402 = vpack.c.bf16 %v398, %v398
  %v403 = vpack.c.bf16 %v399, %v399
  %v404 = vpack.c.bf16 %v400, %v400
  %v405 = vpack.c.bf16 %v401, %v401
  %vm406 = vcmask 519168
  %407 = vst.msk [vmem:[%s3] sm:$0xf] %vm406, %v402
  %408 = vst.msk [vmem:[%s3 + $0x4] sm:$0xf] %vm406, %v403
  %409 = vst.msk [vmem:[%s3 + $0x8] sm:$0xf] %vm406, %v404
  %410 = vst.msk [vmem:[%s3 + $0xc] sm:$0xf] %vm406, %v405
  // Predicated region
  $region14: #{noisy_dqn_forward.5} parent=0 // pred_check
    _
  $region15: #{noisy_dqn_forward.5} parent=0 // pred_check_branch
    %412 = sbr.rel (0) target = $region17
  $region16: #{noisy_dqn_forward.5} parent=0 // pred_region
    _
  $region17: #{noisy_dqn_forward.5} parent=0 // pred_fallthru
    _
  // Predicated region
  $region18: #{noisy_dqn_forward.5} parent=0 // pred_check
    _
  $region19: #{noisy_dqn_forward.5} parent=0 // pred_check_branch
    %414 = sbr.rel (0) target = $region21
  $region20: #{noisy_dqn_forward.5} parent=0 // pred_region
    _
  $region21: #{noisy_dqn_forward.5} parent=0 // pred_fallthru
    _

// kernel: noisy_dqn_forward.6
$region0: #{noisy_dqn_forward.6}
  #allocation0 [shape = 'u32[]', space=smem, size = 0x4, offset = 0x4, fixed_abs, tag = 'smem constant byte address 0x4 - core index']
  #allocation1 [shape = 'u32[72,128]{1,0:T(1,128)}', space=vmem, size = 0x9000, scoped, tag = 'internal scratch']
  %s0 = inlined_call_operand.vmem [shape: bf16[16,640], index: 0, kind: input, shape index: {}]
  %s1 = inlined_call_operand.vmem [shape: bf16[640,64], index: 1, kind: input, shape index: {}]
  %s2 = inlined_call_operand.vmem [shape: f32[1,64], index: 2, kind: input, shape index: {}]
  %s3 = inlined_call_operand.vmem [shape: bf16[16,64], index: 3, kind: output, shape index: {}]
  %s4 = sld [smem:[#allocation0]]
  $region22: #{noisy_dqn_forward.6} parent=0
    _
  %s6 = ssub.s32 1, %s4
  %s7 = scalar_select 0, %s6, %s4
  // Predicated region
  $region2: #{noisy_dqn_forward.6} parent=0 // pred_check
    _
  $region3: #{noisy_dqn_forward.6} parent=0 // pred_check_branch
    %9 = sbr.rel (0) target = $region5
  $region4: #{noisy_dqn_forward.6} parent=0 // pred_region
    _
  $region5: #{noisy_dqn_forward.6} parent=0 // pred_fallthru
    _
  // Predicated region
  $region6: #{noisy_dqn_forward.6} parent=0 // pred_check
    _
  $region7: #{noisy_dqn_forward.6} parent=0 // pred_check_branch
    %11 = sbr.rel (0) target = $region9
  $region8: #{noisy_dqn_forward.6} parent=0 // pred_region
    _
  $region9: #{noisy_dqn_forward.6} parent=0 // pred_fallthru
    _
  // Predicated region
  $region10: #{noisy_dqn_forward.6} parent=0 // pred_check
    _
  $region11: #{noisy_dqn_forward.6} parent=0 // pred_check_branch
    %13 = sbr.rel (0) target = $region13
  $region12: #{noisy_dqn_forward.6} parent=0 // pred_region
    _
  $region13: #{noisy_dqn_forward.6} parent=0 // pred_fallthru
    _
  %v14 = vld [vmem:[%s0] sm:$0xff]
  %v15 = vld [vmem:[%s0 + $0x8] sm:$0xff]
  %v16 = vld [vmem:[%s0 + $0x10] sm:$0xf]
  %v17 = vld [vmem:[%s0 + $0x14] sm:$0xff]
  %v18 = vld [vmem:[%s0 + $0x1c] sm:$0xff]
  %v19 = vld [vmem:[%s0 + $0x24] sm:$0xf]
  %v20 = vld [vmem:[%s1] sm:$0xf]
  %v21 = vld [vmem:[%s1 + $0x4] sm:$0xf]
  %v22 = vld [vmem:[%s1 + $0x8] sm:$0xf]
  %v23 = vld [vmem:[%s1 + $0xc] sm:$0xf]
  %v24 = vld [vmem:[%s1 + $0x10] sm:$0xf]
  %v25 = vld [vmem:[%s1 + $0x14] sm:$0xf]
  %v26 = vld [vmem:[%s1 + $0x18] sm:$0xf]
  %v27 = vld [vmem:[%s1 + $0x1c] sm:$0xf]
  %v28 = vld [vmem:[%s1 + $0x20] sm:$0xf]
  %v29 = vld [vmem:[%s1 + $0x24] sm:$0xf]
  %v30 = vld [vmem:[%s1 + $0x28] sm:$0xf]
  %v31 = vld [vmem:[%s1 + $0x2c] sm:$0xf]
  %v32 = vld [vmem:[%s1 + $0x30] sm:$0xf]
  %v33 = vld [vmem:[%s1 + $0x34] sm:$0xf]
  %v34 = vld [vmem:[%s1 + $0x38] sm:$0xf]
  %v35 = vld [vmem:[%s1 + $0x3c] sm:$0xf]
  %v36 = vld [vmem:[%s1 + $0x40] sm:$0xf]
  %v37 = vld [vmem:[%s1 + $0x44] sm:$0xf]
  %v38 = vld [vmem:[%s1 + $0x48] sm:$0xf]
  %v39 = vld [vmem:[%s1 + $0x4c] sm:$0xf]
  %v40 = vld [vmem:[%s1 + $0x50] sm:$0xf]
  %v41 = vld [vmem:[%s1 + $0x54] sm:$0xf]
  %v42 = vld [vmem:[%s1 + $0x58] sm:$0xf]
  %v43 = vld [vmem:[%s1 + $0x5c] sm:$0xf]
  %v44 = vld [vmem:[%s1 + $0x60] sm:$0xf]
  %v45 = vld [vmem:[%s1 + $0x64] sm:$0xf]
  %v46 = vld [vmem:[%s1 + $0x68] sm:$0xf]
  %v47 = vld [vmem:[%s1 + $0x6c] sm:$0xf]
  %v48 = vld [vmem:[%s1 + $0x70] sm:$0xf]
  %v49 = vld [vmem:[%s1 + $0x74] sm:$0xf]
  %v50 = vld [vmem:[%s1 + $0x78] sm:$0xf]
  %v51 = vld [vmem:[%s1 + $0x7c] sm:$0xf]
  %v52 = vld [vmem:[%s1 + $0x80] sm:$0xf]
  %v53 = vld [vmem:[%s1 + $0x84] sm:$0xf]
  %v54 = vld [vmem:[%s1 + $0x88] sm:$0xf]
  %v55 = vld [vmem:[%s1 + $0x8c] sm:$0xf]
  %v56 = vld [vmem:[%s1 + $0x90] sm:$0xf]
  %v57 = vld [vmem:[%s1 + $0x94] sm:$0xf]
  %v58 = vld [vmem:[%s1 + $0x98] sm:$0xf]
  %v59 = vld [vmem:[%s1 + $0x9c] sm:$0xf]
  %v60 = vld [vmem:[%s1 + $0xa0] sm:$0xf]
  %v61 = vld [vmem:[%s1 + $0xa4] sm:$0xf]
  %v62 = vld [vmem:[%s1 + $0xa8] sm:$0xf]
  %v63 = vld [vmem:[%s1 + $0xac] sm:$0xf]
  %v64 = vld [vmem:[%s1 + $0xb0] sm:$0xf]
  %v65 = vld [vmem:[%s1 + $0xb4] sm:$0xf]
  %v66 = vld [vmem:[%s1 + $0xb8] sm:$0xf]
  %v67 = vld [vmem:[%s1 + $0xbc] sm:$0xf]
  %v68 = vld [vmem:[%s1 + $0xc0] sm:$0xf]
  %v69 = vld [vmem:[%s1 + $0xc4] sm:$0xf]
  %v70 = vld [vmem:[%s1 + $0xc8] sm:$0xf]
  %v71 = vld [vmem:[%s1 + $0xcc] sm:$0xf]
  %v72 = vld [vmem:[%s1 + $0xd0] sm:$0xf]
  %v73 = vld [vmem:[%s1 + $0xd4] sm:$0xf]
  %v74 = vld [vmem:[%s1 + $0xd8] sm:$0xf]
  %v75 = vld [vmem:[%s1 + $0xdc] sm:$0xf]
  %v76 = vld [vmem:[%s1 + $0xe0] sm:$0xf]
  %v77 = vld [vmem:[%s1 + $0xe4] sm:$0xf]
  %v78 = vld [vmem:[%s1 + $0xe8] sm:$0xf]
  %v79 = vld [vmem:[%s1 + $0xec] sm:$0xf]
  %v80 = vld [vmem:[%s1 + $0xf0] sm:$0xf]
  %v81 = vld [vmem:[%s1 + $0xf4] sm:$0xf]
  %v82 = vld [vmem:[%s1 + $0xf8] sm:$0xf]
  %v83 = vld [vmem:[%s1 + $0xfc] sm:$0xf]
  %v84 = vld [vmem:[%s1 + $0x100] sm:$0xf]
  %v85 = vld [vmem:[%s1 + $0x104] sm:$0xf]
  %v86 = vld [vmem:[%s1 + $0x108] sm:$0xf]
  %v87 = vld [vmem:[%s1 + $0x10c] sm:$0xf]
  %v88 = vld [vmem:[%s1 + $0x110] sm:$0xf]
  %v89 = vld [vmem:[%s1 + $0x114] sm:$0xf]
  %v90 = vld [vmem:[%s1 + $0x118] sm:$0xf]
  %v91 = vld [vmem:[%s1 + $0x11c] sm:$0xf]
  %v92 = vld [vmem:[%s1 + $0x120] sm:$0xf]
  %v93 = vld [vmem:[%s1 + $0x124] sm:$0xf]
  %v94 = vld [vmem:[%s1 + $0x128] sm:$0xf]
  %v95 = vld [vmem:[%s1 + $0x12c] sm:$0xf]
  %v96 = vld [vmem:[%s1 + $0x130] sm:$0xf]
  %v97 = vld [vmem:[%s1 + $0x134] sm:$0xf]
  %v98 = vld [vmem:[%s1 + $0x138] sm:$0xf]
  %v99 = vld [vmem:[%s1 + $0x13c] sm:$0xf]
  %v100 = vld [vmem:[%s2] sm:$0x1]
  %v102 = vperm.slane %v100, 0
  %v110 = vunpack.c.l.b16 %v14
  %v111 = vunpack.c.h.b16 %v14
  %v112 = vunpack.c.l.b16 %v15
  %v113 = vunpack.c.h.b16 %v15
  %v114 = vunpack.c.l.b16 %v16
  %v115 = vunpack.c.l.b16 %v17
  %v116 = vunpack.c.h.b16 %v17
  %v117 = vunpack.c.l.b16 %v18
  %v118 = vunpack.c.h.b16 %v18
  %v119 = vunpack.c.l.b16 %v19
  %v120 = vpack.c.b16 %v115, %v110
  %v121 = vpack.c.b16 %v116, %v111
  %v122 = vpack.c.b16 %v117, %v112
  %v123 = vpack.c.b16 %v118, %v113
  %v124 = vpack.c.b16 %v119, %v114
  %v210 = vunpack.c.l.b16 %v20
  %v211 = vunpack.c.l.b16 %v21
  %v212 = vunpack.c.l.b16 %v22
  %v213 = vunpack.c.l.b16 %v23
  %v214 = vunpack.c.l.b16 %v24
  %v215 = vunpack.c.l.b16 %v25
  %v216 = vunpack.c.l.b16 %v26
  %v217 = vunpack.c.l.b16 %v27
  %v218 = vunpack.c.l.b16 %v28
  %v219 = vunpack.c.l.b16 %v29
  %v220 = vunpack.c.l.b16 %v30
  %v221 = vunpack.c.l.b16 %v31
  %v222 = vunpack.c.l.b16 %v32
  %v223 = vunpack.c.l.b16 %v33
  %v224 = vunpack.c.l.b16 %v34
  %v225 = vunpack.c.l.b16 %v35
  %v226 = vunpack.c.l.b16 %v36
  %v227 = vunpack.c.l.b16 %v37
  %v228 = vunpack.c.l.b16 %v38
  %v229 = vunpack.c.l.b16 %v39
  %v230 = vunpack.c.l.b16 %v40
  %v231 = vunpack.c.l.b16 %v41
  %v232 = vunpack.c.l.b16 %v42
  %v233 = vunpack.c.l.b16 %v43
  %v234 = vunpack.c.l.b16 %v44
  %v235 = vunpack.c.l.b16 %v45
  %v236 = vunpack.c.l.b16 %v46
  %v237 = vunpack.c.l.b16 %v47
  %v238 = vunpack.c.l.b16 %v48
  %v239 = vunpack.c.l.b16 %v49
  %v240 = vunpack.c.l.b16 %v50
  %v241 = vunpack.c.l.b16 %v51
  %v242 = vunpack.c.l.b16 %v52
  %v243 = vunpack.c.l.b16 %v53
  %v244 = vunpack.c.l.b16 %v54
  %v245 = vunpack.c.l.b16 %v55
  %v246 = vunpack.c.l.b16 %v56
  %v247 = vunpack.c.l.b16 %v57
  %v248 = vunpack.c.l.b16 %v58
  %v249 = vunpack.c.l.b16 %v59
  %v250 = vunpack.c.l.b16 %v60
  %v251 = vunpack.c.l.b16 %v61
  %v252 = vunpack.c.l.b16 %v62
  %v253 = vunpack.c.l.b16 %v63
  %v254 = vunpack.c.l.b16 %v64
  %v255 = vunpack.c.l.b16 %v65
  %v256 = vunpack.c.l.b16 %v66
  %v257 = vunpack.c.l.b16 %v67
  %v258 = vunpack.c.l.b16 %v68
  %v259 = vunpack.c.l.b16 %v69
  %v260 = vunpack.c.l.b16 %v70
  %v261 = vunpack.c.l.b16 %v71
  %v262 = vunpack.c.l.b16 %v72
  %v263 = vunpack.c.l.b16 %v73
  %v264 = vunpack.c.l.b16 %v74
  %v265 = vunpack.c.l.b16 %v75
  %v266 = vunpack.c.l.b16 %v76
  %v267 = vunpack.c.l.b16 %v77
  %v268 = vunpack.c.l.b16 %v78
  %v269 = vunpack.c.l.b16 %v79
  %v270 = vunpack.c.l.b16 %v80
  %v271 = vunpack.c.l.b16 %v81
  %v272 = vunpack.c.l.b16 %v82
  %v273 = vunpack.c.l.b16 %v83
  %v274 = vunpack.c.l.b16 %v84
  %v275 = vunpack.c.l.b16 %v85
  %v276 = vunpack.c.l.b16 %v86
  %v277 = vunpack.c.l.b16 %v87
  %v278 = vunpack.c.l.b16 %v88
  %v279 = vunpack.c.l.b16 %v89
  %v280 = vunpack.c.l.b16 %v90
  %v281 = vunpack.c.l.b16 %v91
  %v282 = vunpack.c.l.b16 %v92
  %v283 = vunpack.c.l.b16 %v93
  %v284 = vunpack.c.l.b16 %v94
  %v285 = vunpack.c.l.b16 %v95
  %v286 = vunpack.c.l.b16 %v96
  %v287 = vunpack.c.l.b16 %v97
  %v288 = vunpack.c.l.b16 %v98
  %v289 = vunpack.c.l.b16 %v99
  %v290 = vpack.c.b16 %v211, %v210
  %v291 = vpack.c.b16 %v213, %v212
  %v292 = vpack.c.b16 %v215, %v214
  %v293 = vpack.c.b16 %v217, %v216
  %v294 = vpack.c.b16 %v219, %v218
  %v295 = vpack.c.b16 %v221, %v220
  %v296 = vpack.c.b16 %v223, %v222
  %v297 = vpack.c.b16 %v225, %v224
  %v298 = vpack.c.b16 %v227, %v226
  %v299 = vpack.c.b16 %v229, %v228
  %v300 = vpack.c.b16 %v231, %v230
  %v301 = vpack.c.b16 %v233, %v232
  %v302 = vpack.c.b16 %v235, %v234
  %v303 = vpack.c.b16 %v237, %v236
  %v304 = vpack.c.b16 %v239, %v238
  %v305 = vpack.c.b16 %v241, %v240
  %v306 = vpack.c.b16 %v243, %v242
  %v307 = vpack.c.b16 %v245, %v244
  %v308 = vpack.c.b16 %v247, %v246
  %v309 = vpack.c.b16 %v249, %v248
  %v310 = vpack.c.b16 %v251, %v250
  %v311 = vpack.c.b16 %v253, %v252
  %v312 = vpack.c.b16 %v255, %v254
  %v313 = vpack.c.b16 %v257, %v256
  %v314 = vpack.c.b16 %v259, %v258
  %v315 = vpack.c.b16 %v261, %v260
  %v316 = vpack.c.b16 %v263, %v262
  %v317 = vpack.c.b16 %v265, %v264
  %v318 = vpack.c.b16 %v267, %v266
  %v319 = vpack.c.b16 %v269, %v268
  %v320 = vpack.c.b16 %v271, %v270
  %v321 = vpack.c.b16 %v273, %v272
  %v322 = vpack.c.b16 %v275, %v274
  %v323 = vpack.c.b16 %v277, %v276
  %v324 = vpack.c.b16 %v279, %v278
  %v325 = vpack.c.b16 %v281, %v280
  %v326 = vpack.c.b16 %v283, %v282
  %v327 = vpack.c.b16 %v285, %v284
  %v328 = vpack.c.b16 %v287, %v286
  %v329 = vpack.c.b16 %v289, %v288
  %370 = vmatpush.bf16.msra.mxu0 %v297
  %371 = vmatpush.bf16.msra.mxu0 %v296
  %372 = vmatpush.bf16.msra.mxu0 %v295
  %373 = vmatpush.bf16.msra.mxu0 %v294
  %374 = vmatpush.bf16.msra.mxu0 %v293
  %375 = vmatpush.bf16.msra.mxu0 %v292
  %376 = vmatpush.bf16.msra.mxu0 %v291
  %377 = vmatpush.bf16.msra.mxu0 %v290
  %378 = vmatmul.bf16.gmra.mxu0 %v120
  %v379 = vpop.f32.mrf.mxu0
  %v380 = vadd.f32 %v102, %v379
  %v381 = vpop.f32.mrf.mxu0
  %v382 = vadd.f32 %v102, %v381
  %383 = vdwg.mxu0
  %384 = vmatpush.bf16.msra.mxu0 %v305
  %385 = vmatpush.bf16.msra.mxu0 %v304
  %386 = vmatpush.bf16.msra.mxu0 %v303
  %387 = vmatpush.bf16.msra.mxu0 %v302
  %388 = vmatpush.bf16.msra.mxu0 %v301
  %389 = vmatpush.bf16.msra.mxu0 %v300
  %390 = vmatpush.bf16.msra.mxu0 %v299
  %391 = vmatpush.bf16.msra.mxu0 %v298
  %392 = vmatmul.bf16.gmra.mxu0 %v121
  %v393 = vpop.f32.mrf.mxu0
  %v394 = vadd.f32 %v380, %v393
  %v395 = vpop.f32.mrf.mxu0
  %v396 = vadd.f32 %v382, %v395
  %397 = vdwg.mxu0
  %398 = vmatpush.bf16.msra.mxu0 %v313
  %399 = vmatpush.bf16.msra.mxu0 %v312
  %400 = vmatpush.bf16.msra.mxu0 %v311
  %401 = vmatpush.bf16.msra.mxu0 %v310
  %402 = vmatpush.bf16.msra.mxu0 %v309
  %403 = vmatpush.bf16.msra.mxu0 %v308
  %404 = vmatpush.bf16.msra.mxu0 %v307
  %405 = vmatpush.bf16.msra.mxu0 %v306
  %406 = vmatmul.bf16.gmra.mxu0 %v122
  %v407 = vpop.f32.mrf.mxu0
  %v408 = vadd.f32 %v394, %v407
  %v409 = vpop.f32.mrf.mxu0
  %v410 = vadd.f32 %v396, %v409
  %411 = vdwg.mxu0
  %412 = vmatpush.bf16.msra.mxu0 %v321
  %413 = vmatpush.bf16.msra.mxu0 %v320
  %414 = vmatpush.bf16.msra.mxu0 %v319
  %415 = vmatpush.bf16.msra.mxu0 %v318
  %416 = vmatpush.bf16.msra.mxu0 %v317
  %417 = vmatpush.bf16.msra.mxu0 %v316
  %418 = vmatpush.bf16.msra.mxu0 %v315
  %419 = vmatpush.bf16.msra.mxu0 %v314
  %420 = vmatmul.bf16.gmra.mxu0 %v123
  %v421 = vpop.f32.mrf.mxu0
  %v422 = vadd.f32 %v408, %v421
  %v423 = vpop.f32.mrf.mxu0
  %v424 = vadd.f32 %v410, %v423
  %425 = vdwg.mxu0
  %426 = vmatpush.bf16.msra.mxu0 %v329
  %427 = vmatpush.bf16.msra.mxu0 %v328
  %428 = vmatpush.bf16.msra.mxu0 %v327
  %429 = vmatpush.bf16.msra.mxu0 %v326
  %430 = vmatpush.bf16.msra.mxu0 %v325
  %431 = vmatpush.bf16.msra.mxu0 %v324
  %432 = vmatpush.bf16.msra.mxu0 %v323
  %433 = vmatpush.bf16.msra.mxu0 %v322
  %434 = vmatmul.bf16.gmra.mxu0 %v124
  %v435 = vpop.f32.mrf.mxu0
  %v436 = vadd.f32 %v422, %v435
  %v437 = vpop.f32.mrf.mxu0
  %v438 = vadd.f32 %v424, %v437
  %439 = vdwg.mxu0
  %v440 = vmax.f32 %v436, 0.0
  %v441 = vmax.f32 %v438, 0.0
  %v442 = vpack.c.bf16 %v440, %v440
  %v443 = vpack.c.bf16 %v441, %v441
  %vm444 = vcmask 519168
  %445 = vst.msk [vmem:[%s3] sm:$0xf] %vm444, %v442
  %446 = vst.msk [vmem:[%s3 + $0x4] sm:$0xf] %vm444, %v443
  // Predicated region
  $region14: #{noisy_dqn_forward.6} parent=0 // pred_check
    _
  $region15: #{noisy_dqn_forward.6} parent=0 // pred_check_branch
    %448 = sbr.rel (0) target = $region17
  $region16: #{noisy_dqn_forward.6} parent=0 // pred_region
    _
  $region17: #{noisy_dqn_forward.6} parent=0 // pred_fallthru
    _
  // Predicated region
  $region18: #{noisy_dqn_forward.6} parent=0 // pred_check
    _
  $region19: #{noisy_dqn_forward.6} parent=0 // pred_check_branch
    %450 = sbr.rel (0) target = $region21
  $region20: #{noisy_dqn_forward.6} parent=0 // pred_region
    _
  $region21: #{noisy_dqn_forward.6} parent=0 // pred_fallthru
    _

// kernel: noisy_dqn_forward.7
$region0: #{noisy_dqn_forward.7}
  #allocation0 [shape = 'u32[]', space=smem, size = 0x4, offset = 0x4, fixed_abs, tag = 'smem constant byte address 0x4 - core index']
  #allocation1 [shape = 'u32[72,128]{1,0:T(1,128)}', space=vmem, size = 0x9000, scoped, tag = 'internal scratch']
  #allocation2 [shape = 'f32[1,1]{1,0:T(1,128)S(1)}', space=vmem, size = 0x200, scoped, tag = 'scoped memory for noisy_dqn_forward.7']
  %s0 = inlined_call_operand.vmem [shape: bf16[16,64], index: 0, kind: input, shape index: {}]
  %s1 = inlined_call_operand.vmem [shape: bf16[64,1024], index: 1, kind: input, shape index: {}]
  %s2 = inlined_call_operand.vmem [shape: f32[1,1024], index: 2, kind: input, shape index: {}]
  %s3 = inlined_call_operand.vmem [shape: f32[1,512], index: 3, kind: input, shape index: {}]
  %s4 = inlined_call_operand.<no memory space> [shape: f32[1,1], index: 4, kind: input, shape index: {}]
  %s5 = inlined_call_operand.vmem [shape: bf16[512,256], index: 5, kind: input, shape index: {}]
  %s6 = inlined_call_operand.vmem [shape: f32[1,256], index: 6, kind: input, shape index: {}]
  %s7 = inlined_call_operand.vmem [shape: f32[16,128], index: 7, kind: output, shape index: {}]
  %s8 = sld [smem:[#allocation0]]
  $region38: #{noisy_dqn_forward.7} parent=0
    _
  %s10 = ssub.s32 1, %s8
  %s11 = scalar_select 0, %s10, %s8
  %v12 = vstv %s4
  %13 = vst [vmem:[#allocation2] sm:$0x1] %v12
  // Predicated region
  $region2: #{noisy_dqn_forward.7} parent=0 // pred_check
    _
  $region3: #{noisy_dqn_forward.7} parent=0 // pred_check_branch
    %15 = sbr.rel (0) target = $region5
  $region4: #{noisy_dqn_forward.7} parent=0 // pred_region
    _
  $region5: #{noisy_dqn_forward.7} parent=0 // pred_fallthru
    _
  // Predicated region
  $region6: #{noisy_dqn_forward.7} parent=0 // pred_check
    _
  $region7: #{noisy_dqn_forward.7} parent=0 // pred_check_branch
    %17 = sbr.rel (0) target = $region9
  $region8: #{noisy_dqn_forward.7} parent=0 // pred_region
    _
  $region9: #{noisy_dqn_forward.7} parent=0 // pred_fallthru
    _
  // Predicated region
  $region10: #{noisy_dqn_forward.7} parent=0 // pred_check
    _
  $region11: #{noisy_dqn_forward.7} parent=0 // pred_check_branch
    %19 = sbr.rel (0) target = $region13
  $region12: #{noisy_dqn_forward.7} parent=0 // pred_region
    _
  $region13: #{noisy_dqn_forward.7} parent=0 // pred_fallthru
    _
  // Predicated region
  $region14: #{noisy_dqn_forward.7} parent=0 // pred_check
    _
  $region15: #{noisy_dqn_forward.7} parent=0 // pred_check_branch
    %21 = sbr.rel (0) target = $region17
  $region16: #{noisy_dqn_forward.7} parent=0 // pred_region
    _
  $region17: #{noisy_dqn_forward.7} parent=0 // pred_fallthru
    _
  // Predicated region
  $region18: #{noisy_dqn_forward.7} parent=0 // pred_check
    _
  $region19: #{noisy_dqn_forward.7} parent=0 // pred_check_branch
    %23 = sbr.rel (0) target = $region21
  $region20: #{noisy_dqn_forward.7} parent=0 // pred_region
    _
  $region21: #{noisy_dqn_forward.7} parent=0 // pred_fallthru
    _
  // Predicated region
  $region22: #{noisy_dqn_forward.7} parent=0 // pred_check
    _
  $region23: #{noisy_dqn_forward.7} parent=0 // pred_check_branch
    %25 = sbr.rel (0) target = $region25
  $region24: #{noisy_dqn_forward.7} parent=0 // pred_region
    _
  $region25: #{noisy_dqn_forward.7} parent=0 // pred_fallthru
    _
  // Predicated region
  $region26: #{noisy_dqn_forward.7} parent=0 // pred_check
    _
  $region27: #{noisy_dqn_forward.7} parent=0 // pred_check_branch
    %27 = sbr.rel (0) target = $region29
  $region28: #{noisy_dqn_forward.7} parent=0 // pred_region
    _
  $region29: #{noisy_dqn_forward.7} parent=0 // pred_fallthru
    _
  %v29 = vld [vmem:[%s0] sm:$0xf]
  %v30 = vld [vmem:[%s0 + $0x4] sm:$0xf]
  %v31 = vld [vmem:[%s1] sm:$0xff]
  %v32 = vld [vmem:[%s1 + $0x8] sm:$0xff]
  %v33 = vld [vmem:[%s1 + $0x10] sm:$0xff]
  %v34 = vld [vmem:[%s1 + $0x18] sm:$0xff]
  %v35 = vld [vmem:[%s1 + $0x20] sm:$0xff]
  %v36 = vld [vmem:[%s1 + $0x28] sm:$0xff]
  %v37 = vld [vmem:[%s1 + $0x30] sm:$0xff]
  %v38 = vld [vmem:[%s1 + $0x38] sm:$0xff]
  %v39 = vld [vmem:[%s1 + $0x40] sm:$0xff]
  %v40 = vld [vmem:[%s1 + $0x48] sm:$0xff]
  %v41 = vld [vmem:[%s1 + $0x50] sm:$0xff]
  %v42 = vld [vmem:[%s1 + $0x58] sm:$0xff]
  %v43 = vld [vmem:[%s1 + $0x60] sm:$0xff]
  %v44 = vld [vmem:[%s1 + $0x68] sm:$0xff]
  %v45 = vld [vmem:[%s1 + $0x70] sm:$0xff]
  %v46 = vld [vmem:[%s1 + $0x78] sm:$0xff]
  %v47 = vld [vmem:[%s1 + $0x80] sm:$0xff]
  %v48 = vld [vmem:[%s1 + $0x88] sm:$0xff]
  %v49 = vld [vmem:[%s1 + $0x90] sm:$0xff]
  %v50 = vld [vmem:[%s1 + $0x98] sm:$0xff]
  %v51 = vld [vmem:[%s1 + $0xa0] sm:$0xff]
  %v52 = vld [vmem:[%s1 + $0xa8] sm:$0xff]
  %v53 = vld [vmem:[%s1 + $0xb0] sm:$0xff]
  %v54 = vld [vmem:[%s1 + $0xb8] sm:$0xff]
  %v55 = vld [vmem:[%s1 + $0xc0] sm:$0xff]
  %v56 = vld [vmem:[%s1 + $0xc8] sm:$0xff]
  %v57 = vld [vmem:[%s1 + $0xd0] sm:$0xff]
  %v58 = vld [vmem:[%s1 + $0xd8] sm:$0xff]
  %v59 = vld [vmem:[%s1 + $0xe0] sm:$0xff]
  %v60 = vld [vmem:[%s1 + $0xe8] sm:$0xff]
  %v61 = vld [vmem:[%s1 + $0xf0] sm:$0xff]
  %v62 = vld [vmem:[%s1 + $0xf8] sm:$0xff]
  %v63 = vld [vmem:[%s2] sm:$0xff]
  %v65 = vperm.slane %v63, 0
  %v66 = vperm.slane %v63, 1
  %v67 = vperm.slane %v63, 2
  %v68 = vperm.slane %v63, 3
  %v69 = vperm.slane %v63, 4
  %v70 = vperm.slane %v63, 5
  %v71 = vperm.slane %v63, 6
  %v72 = vperm.slane %v63, 7
  %v83 = vunpack.c.l.b16 %v29
  %v84 = vunpack.c.l.b16 %v30
  %v85 = vpack.c.b16 %v84, %v83
  %v118 = vunpack.c.l.b16 %v31
  %v119 = vunpack.c.h.b16 %v31
  %v120 = vunpack.c.l.b16 %v32
  %v121 = vunpack.c.h.b16 %v32
  %v122 = vunpack.c.l.b16 %v33
  %v123 = vunpack.c.h.b16 %v33
  %v124 = vunpack.c.l.b16 %v34
  %v125 = vunpack.c.h.b16 %v34
  %v126 = vunpack.c.l.b16 %v35
  %v127 = vunpack.c.h.b16 %v35
  %v128 = vunpack.c.l.b16 %v36
  %v129 = vunpack.c.h.b16 %v36
  %v130 = vunpack.c.l.b16 %v37
  %v131 = vunpack.c.h.b16 %v37
  %v132 = vunpack.c.l.b16 %v38
  %v133 = vunpack.c.h.b16 %v38
  %v134 = vunpack.c.l.b16 %v39
  %v135 = vunpack.c.h.b16 %v39
  %v136 = vunpack.c.l.b16 %v40
  %v137 = vunpack.c.h.b16 %v40
  %v138 = vunpack.c.l.b16 %v41
  %v139 = vunpack.c.h.b16 %v41
  %v140 = vunpack.c.l.b16 %v42
  %v141 = vunpack.c.h.b16 %v42
  %v142 = vunpack.c.l.b16 %v43
  %v143 = vunpack.c.h.b16 %v43
  %v144 = vunpack.c.l.b16 %v44
  %v145 = vunpack.c.h.b16 %v44
  %v146 = vunpack.c.l.b16 %v45
  %v147 = vunpack.c.h.b16 %v45
  %v148 = vunpack.c.l.b16 %v46
  %v149 = vunpack.c.h.b16 %v46
  %v150 = vunpack.c.l.b16 %v47
  %v151 = vunpack.c.h.b16 %v47
  %v152 = vunpack.c.l.b16 %v48
  %v153 = vunpack.c.h.b16 %v48
  %v154 = vunpack.c.l.b16 %v49
  %v155 = vunpack.c.h.b16 %v49
  %v156 = vunpack.c.l.b16 %v50
  %v157 = vunpack.c.h.b16 %v50
  %v158 = vunpack.c.l.b16 %v51
  %v159 = vunpack.c.h.b16 %v51
  %v160 = vunpack.c.l.b16 %v52
  %v161 = vunpack.c.h.b16 %v52
  %v162 = vunpack.c.l.b16 %v53
  %v163 = vunpack.c.h.b16 %v53
  %v164 = vunpack.c.l.b16 %v54
  %v165 = vunpack.c.h.b16 %v54
  %v166 = vunpack.c.l.b16 %v55
  %v167 = vunpack.c.h.b16 %v55
  %v168 = vunpack.c.l.b16 %v56
  %v169 = vunpack.c.h.b16 %v56
  %v170 = vunpack.c.l.b16 %v57
  %v171 = vunpack.c.h.b16 %v57
  %v172 = vunpack.c.l.b16 %v58
  %v173 = vunpack.c.h.b16 %v58
  %v174 = vunpack.c.l.b16 %v59
  %v175 = vunpack.c.h.b16 %v59
  %v176 = vunpack.c.l.b16 %v60
  %v177 = vunpack.c.h.b16 %v60
  %v178 = vunpack.c.l.b16 %v61
  %v179 = vunpack.c.h.b16 %v61
  %v180 = vunpack.c.l.b16 %v62
  %v181 = vunpack.c.h.b16 %v62
  %v182 = vpack.c.b16 %v126, %v118
  %v183 = vpack.c.b16 %v127, %v119
  %v184 = vpack.c.b16 %v128, %v120
  %v185 = vpack.c.b16 %v129, %v121
  %v186 = vpack.c.b16 %v130, %v122
  %v187 = vpack.c.b16 %v131, %v123
  %v188 = vpack.c.b16 %v132, %v124
  %v189 = vpack.c.b16 %v133, %v125
  %v190 = vpack.c.b16 %v142, %v134
  %v191 = vpack.c.b16 %v143, %v135
  %v192 = vpack.c.b16 %v144, %v136
  %v193 = vpack.c.b16 %v145, %v137
  %v194 = vpack.c.b16 %v146, %v138
  %v195 = vpack.c.b16 %v147, %v139
  %v196 = vpack.c.b16 %v148, %v140
  %v197 = vpack.c.b16 %v149, %v141
  %v198 = vpack.c.b16 %v158, %v150
  %v199 = vpack.c.b16 %v159, %v151
  %v200 = vpack.c.b16 %v160, %v152
  %v201 = vpack.c.b16 %v161, %v153
  %v202 = vpack.c.b16 %v162, %v154
  %v203 = vpack.c.b16 %v163, %v155
  %v204 = vpack.c.b16 %v164, %v156
  %v205 = vpack.c.b16 %v165, %v157
  %v206 = vpack.c.b16 %v174, %v166
  %v207 = vpack.c.b16 %v175, %v167
  %v208 = vpack.c.b16 %v176, %v168
  %v209 = vpack.c.b16 %v177, %v169
  %v210 = vpack.c.b16 %v178, %v170
  %v211 = vpack.c.b16 %v179, %v171
  %v212 = vpack.c.b16 %v180, %v172
  %v213 = vpack.c.b16 %v181, %v173
  %vm246 = vcmask 523264
  %v248 = vsel %vm246, %v85, 0
  %250 = vmatpush.bf16.msra.mxu0 0
  %251 = vmatpush.bf16.msra.mxu0 0
  %252 = vmatpush.bf16.msra.mxu0 0
  %253 = vmatpush.bf16.msra.mxu0 0
  %254 = vmatpush.bf16.msra.mxu0 %v206
  %255 = vmatpush.bf16.msra.mxu0 %v198
  %256 = vmatpush.bf16.msra.mxu0 %v190
  %257 = vmatpush.bf16.msra.mxu0 %v182
  %258 = vmatmul.bf16.gmra.mxu0 %v248
  %v259 = vpop.f32.mrf.mxu0
  %v260 = vadd.f32 %v65, %v259
  %v261 = vpop.f32.mrf.mxu0
  %v262 = vadd.f32 %v65, %v261
  %263 = vdwg.mxu0
  %264 = vmatpush.bf16.msra.mxu0 0
  %265 = vmatpush.bf16.msra.mxu0 0
  %266 = vmatpush.bf16.msra.mxu0 0
  %267 = vmatpush.bf16.msra.mxu0 0
  %268 = vmatpush.bf16.msra.mxu0 %v207
  %269 = vmatpush.bf16.msra.mxu0 %v199
  %270 = vmatpush.bf16.msra.mxu0 %v191
  %271 = vmatpush.bf16.msra.mxu0 %v183
  %272 = vmatmul.bf16.gmra.mxu0 %v248
  %v273 = vpop.f32.mrf.mxu0
  %v274 = vadd.f32 %v66, %v273
  %v275 = vpop.f32.mrf.mxu0
  %v276 = vadd.f32 %v66, %v275
  %277 = vdwg.mxu0
  %278 = vmatpush.bf16.msra.mxu0 0
  %279 = vmatpush.bf16.msra.mxu0 0
  %280 = vmatpush.bf16.msra.mxu0 0
  %281 = vmatpush.bf16.msra.mxu0 0
  %282 = vmatpush.bf16.msra.mxu0 %v208
  %283 = vmatpush.bf16.msra.mxu0 %v200
  %284 = vmatpush.bf16.msra.mxu0 %v192
  %285 = vmatpush.bf16.msra.mxu0 %v184
  %286 = vmatmul.bf16.gmra.mxu0 %v248
  %v287 = vpop.f32.mrf.mxu0
  %v288 = vadd.f32 %v67, %v287
  %v289 = vpop.f32.mrf.mxu0
  %v290 = vadd.f32 %v67, %v289
  %291 = vdwg.mxu0
  %292 = vmatpush.bf16.msra.mxu0 0
  %293 = vmatpush.bf16.msra.mxu0 0
  %294 = vmatpush.bf16.msra.mxu0 0
  %295 = vmatpush.bf16.msra.mxu0 0
  %296 = vmatpush.bf16.msra.mxu0 %v209
  %297 = vmatpush.bf16.msra.mxu0 %v201
  %298 = vmatpush.bf16.msra.mxu0 %v193
  %299 = vmatpush.bf16.msra.mxu0 %v185
  %300 = vmatmul.bf16.gmra.mxu0 %v248
  %v301 = vpop.f32.mrf.mxu0
  %v302 = vadd.f32 %v68, %v301
  %v303 = vpop.f32.mrf.mxu0
  %v304 = vadd.f32 %v68, %v303
  %305 = vdwg.mxu0
  %306 = vmatpush.bf16.msra.mxu0 0
  %307 = vmatpush.bf16.msra.mxu0 0
  %308 = vmatpush.bf16.msra.mxu0 0
  %309 = vmatpush.bf16.msra.mxu0 0
  %310 = vmatpush.bf16.msra.mxu0 %v210
  %311 = vmatpush.bf16.msra.mxu0 %v202
  %312 = vmatpush.bf16.msra.mxu0 %v194
  %313 = vmatpush.bf16.msra.mxu0 %v186
  %314 = vmatmul.bf16.gmra.mxu0 %v248
  %v315 = vpop.f32.mrf.mxu0
  %v316 = vadd.f32 %v69, %v315
  %v317 = vpop.f32.mrf.mxu0
  %v318 = vadd.f32 %v69, %v317
  %319 = vdwg.mxu0
  %320 = vmatpush.bf16.msra.mxu0 0
  %321 = vmatpush.bf16.msra.mxu0 0
  %322 = vmatpush.bf16.msra.mxu0 0
  %323 = vmatpush.bf16.msra.mxu0 0
  %324 = vmatpush.bf16.msra.mxu0 %v211
  %325 = vmatpush.bf16.msra.mxu0 %v203
  %326 = vmatpush.bf16.msra.mxu0 %v195
  %327 = vmatpush.bf16.msra.mxu0 %v187
  %328 = vmatmul.bf16.gmra.mxu0 %v248
  %v329 = vpop.f32.mrf.mxu0
  %v330 = vadd.f32 %v70, %v329
  %v331 = vpop.f32.mrf.mxu0
  %v332 = vadd.f32 %v70, %v331
  %333 = vdwg.mxu0
  %334 = vmatpush.bf16.msra.mxu0 0
  %335 = vmatpush.bf16.msra.mxu0 0
  %336 = vmatpush.bf16.msra.mxu0 0
  %337 = vmatpush.bf16.msra.mxu0 0
  %338 = vmatpush.bf16.msra.mxu0 %v212
  %339 = vmatpush.bf16.msra.mxu0 %v204
  %340 = vmatpush.bf16.msra.mxu0 %v196
  %341 = vmatpush.bf16.msra.mxu0 %v188
  %342 = vmatmul.bf16.gmra.mxu0 %v248
  %v343 = vpop.f32.mrf.mxu0
  %v344 = vadd.f32 %v71, %v343
  %v345 = vpop.f32.mrf.mxu0
  %v346 = vadd.f32 %v71, %v345
  %347 = vdwg.mxu0
  %348 = vmatpush.bf16.msra.mxu0 0
  %349 = vmatpush.bf16.msra.mxu0 0
  %350 = vmatpush.bf16.msra.mxu0 0
  %351 = vmatpush.bf16.msra.mxu0 0
  %352 = vmatpush.bf16.msra.mxu0 %v213
  %353 = vmatpush.bf16.msra.mxu0 %v205
  %354 = vmatpush.bf16.msra.mxu0 %v197
  %355 = vmatpush.bf16.msra.mxu0 %v189
  %356 = vmatmul.bf16.gmra.mxu0 %v248
  %v357 = vpop.f32.mrf.mxu0
  %v358 = vadd.f32 %v72, %v357
  %v359 = vpop.f32.mrf.mxu0
  %v360 = vadd.f32 %v72, %v359
  %361 = vdwg.mxu0
  %v362 = vmax.f32 %v260, 0.0
  %v363 = vmax.f32 %v274, 0.0
  %v364 = vmax.f32 %v288, 0.0
  %v365 = vmax.f32 %v302, 0.0
  %v366 = vmax.f32 %v316, 0.0
  %v367 = vmax.f32 %v330, 0.0
  %v368 = vmax.f32 %v344, 0.0
  %v369 = vmax.f32 %v358, 0.0
  %v370 = vmax.f32 %v262, 0.0
  %v371 = vmax.f32 %v276, 0.0
  %v372 = vmax.f32 %v290, 0.0
  %v373 = vmax.f32 %v304, 0.0
  %v374 = vmax.f32 %v318, 0.0
  %v375 = vmax.f32 %v332, 0.0
  %v376 = vmax.f32 %v346, 0.0
  %v377 = vmax.f32 %v360, 0.0
  %v378 = vld [vmem:[%s3] sm:$0xf]
  %v380 = vperm.slane %v378, 0
  %v381 = vperm.slane %v378, 1
  %v382 = vperm.slane %v378, 2
  %v383 = vperm.slane %v378, 3
  %v388 = vmul.f32 %v366, %v380
  %v389 = vmul.f32 %v367, %v381
  %v390 = vmul.f32 %v368, %v382
  %v391 = vmul.f32 %v369, %v383
  %v392 = vmul.f32 %v374, %v380
  %v393 = vmul.f32 %v375, %v381
  %v394 = vmul.f32 %v376, %v382
  %v395 = vmul.f32 %v377, %v383
  %v396 = vadd.f32 %v388, %v389
  %v397 = vadd.f32 %v396, %v390
  %v398 = vadd.f32 %v397, %v391
  %399 = vadd.xlane.f32.xlu0 %v398
  %v400 = vpop.xlane.xlu0 %399
  %v401 = vadd.f32 %v392, %v393
  %v402 = vadd.f32 %v401, %v394
  %v403 = vadd.f32 %v402, %v395
  %404 = vadd.xlane.f32.xlu0 %v403
  %v405 = vpop.xlane.xlu0 %404
  %v406 = vld [vmem:[#allocation2] sm:$0x1]
  %v408 = vperm.slane %v406, 0
  %v410 = vadd.f32 %v400, %v408
  %v411 = vadd.f32 %v405, %v408
  %v412 = vpack.c.bf16 %v370, %v362
  %v413 = vpack.c.bf16 %v371, %v363
  %v414 = vpack.c.bf16 %v372, %v364
  %v415 = vpack.c.bf16 %v373, %v365
  %v416 = vld [vmem:[%s5] sm:$0xff]
  %v417 = vld [vmem:[%s5 + $0x8] sm:$0xff]
  %v418 = vld [vmem:[%s5 + $0x10] sm:$0xff]
  %v419 = vld [vmem:[%s5 + $0x18] sm:$0xff]
  %v420 = vld [vmem:[%s5 + $0x20] sm:$0xff]
  %v421 = vld [vmem:[%s5 + $0x28] sm:$0xff]
  %v422 = vld [vmem:[%s5 + $0x30] sm:$0xff]
  %v423 = vld [vmem:[%s5 + $0x38] sm:$0xff]
  %v424 = vld [vmem:[%s5 + $0x40] sm:$0xff]
  %v425 = vld [vmem:[%s5 + $0x48] sm:$0xff]
  %v426 = vld [vmem:[%s5 + $0x50] sm:$0xff]
  %v427 = vld [vmem:[%s5 + $0x58] sm:$0xff]
  %v428 = vld [vmem:[%s5 + $0x60] sm:$0xff]
  %v429 = vld [vmem:[%s5 + $0x68] sm:$0xff]
  %v430 = vld [vmem:[%s5 + $0x70] sm:$0xff]
  %v431 = vld [vmem:[%s5 + $0x78] sm:$0xff]
  %v432 = vld [vmem:[%s5 + $0x80] sm:$0xff]
  %v433 = vld [vmem:[%s5 + $0x88] sm:$0xff]
  %v434 = vld [vmem:[%s5 + $0x90] sm:$0xff]
  %v435 = vld [vmem:[%s5 + $0x98] sm:$0xff]
  %v436 = vld [vmem:[%s5 + $0xa0] sm:$0xff]
  %v437 = vld [vmem:[%s5 + $0xa8] sm:$0xff]
  %v438 = vld [vmem:[%s5 + $0xb0] sm:$0xff]
  %v439 = vld [vmem:[%s5 + $0xb8] sm:$0xff]
  %v440 = vld [vmem:[%s5 + $0xc0] sm:$0xff]
  %v441 = vld [vmem:[%s5 + $0xc8] sm:$0xff]
  %v442 = vld [vmem:[%s5 + $0xd0] sm:$0xff]
  %v443 = vld [vmem:[%s5 + $0xd8] sm:$0xff]
  %v444 = vld [vmem:[%s5 + $0xe0] sm:$0xff]
  %v445 = vld [vmem:[%s5 + $0xe8] sm:$0xff]
  %v446 = vld [vmem:[%s5 + $0xf0] sm:$0xff]
  %v447 = vld [vmem:[%s5 + $0xf8] sm:$0xff]
  %v448 = vld [vmem:[%s5 + $0x100] sm:$0xff]
  %v449 = vld [vmem:[%s5 + $0x108] sm:$0xff]
  %v450 = vld [vmem:[%s5 + $0x110] sm:$0xff]
  %v451 = vld [vmem:[%s5 + $0x118] sm:$0xff]
  %v452 = vld [vmem:[%s5 + $0x120] sm:$0xff]
  %v453 = vld [vmem:[%s5 + $0x128] sm:$0xff]
  %v454 = vld [vmem:[%s5 + $0x130] sm:$0xff]
  %v455 = vld [vmem:[%s5 + $0x138] sm:$0xff]
  %v456 = vld [vmem:[%s5 + $0x140] sm:$0xff]
  %v457 = vld [vmem:[%s5 + $0x148] sm:$0xff]
  %v458 = vld [vmem:[%s5 + $0x150] sm:$0xff]
  %v459 = vld [vmem:[%s5 + $0x158] sm:$0xff]
  %v460 = vld [vmem:[%s5 + $0x160] sm:$0xff]
  %v461 = vld [vmem:[%s5 + $0x168] sm:$0xff]
  %v462 = vld [vmem:[%s5 + $0x170] sm:$0xff]
  %v463 = vld [vmem:[%s5 + $0x178] sm:$0xff]
  %v464 = vld [vmem:[%s5 + $0x180] sm:$0xff]
  %v465 = vld [vmem:[%s5 + $0x188] sm:$0xff]
  %v466 = vld [vmem:[%s5 + $0x190] sm:$0xff]
  %v467 = vld [vmem:[%s5 + $0x198] sm:$0xff]
  %v468 = vld [vmem:[%s5 + $0x1a0] sm:$0xff]
  %v469 = vld [vmem:[%s5 + $0x1a8] sm:$0xff]
  %v470 = vld [vmem:[%s5 + $0x1b0] sm:$0xff]
  %v471 = vld [vmem:[%s5 + $0x1b8] sm:$0xff]
  %v472 = vld [vmem:[%s5 + $0x1c0] sm:$0xff]
  %v473 = vld [vmem:[%s5 + $0x1c8] sm:$0xff]
  %v474 = vld [vmem:[%s5 + $0x1d0] sm:$0xff]
  %v475 = vld [vmem:[%s5 + $0x1d8] sm:$0xff]
  %v476 = vld [vmem:[%s5 + $0x1e0] sm:$0xff]
  %v477 = vld [vmem:[%s5 + $0x1e8] sm:$0xff]
  %v478 = vld [vmem:[%s5 + $0x1f0] sm:$0xff]
  %v479 = vld [vmem:[%s5 + $0x1f8] sm:$0xff]
  %v480 = vld [vmem:[%s6] sm:$0x3]
  %v482 = vperm.slane %v480, 0
  %v483 = vperm.slane %v480, 1
  %v550 = vunpack.c.l.b16 %v416
  %v551 = vunpack.c.h.b16 %v416
  %v552 = vunpack.c.l.b16 %v417
  %v553 = vunpack.c.h.b16 %v417
  %v554 = vunpack.c.l.b16 %v418
  %v555 = vunpack.c.h.b16 %v418
  %v556 = vunpack.c.l.b16 %v419
  %v557 = vunpack.c.h.b16 %v419
  %v558 = vunpack.c.l.b16 %v420
  %v559 = vunpack.c.h.b16 %v420
  %v560 = vunpack.c.l.b16 %v421
  %v561 = vunpack.c.h.b16 %v421
  %v562 = vunpack.c.l.b16 %v422
  %v563 = vunpack.c.h.b16 %v422
  %v564 = vunpack.c.l.b16 %v423
  %v565 = vunpack.c.h.b16 %v423
  %v566 = vunpack.c.l.b16 %v424
  %v567 = vunpack.c.h.b16 %v424
  %v568 = vunpack.c.l.b16 %v425
  %v569 = vunpack.c.h.b16 %v425
  %v570 = vunpack.c.l.b16 %v426
  %v571 = vunpack.c.h.b16 %v426
  %v572 = vunpack.c.l.b16 %v427
  %v573 = vunpack.c.h.b16 %v427
  %v574 = vunpack.c.l.b16 %v428
  %v575 = vunpack.c.h.b16 %v428
  %v576 = vunpack.c.l.b16 %v429
  %v577 = vunpack.c.h.b16 %v429
  %v578 = vunpack.c.l.b16 %v430
  %v579 = vunpack.c.h.b16 %v430
  %v580 = vunpack.c.l.b16 %v431
  %v581 = vunpack.c.h.b16 %v431
  %v582 = vunpack.c.l.b16 %v432
  %v583 = vunpack.c.h.b16 %v432
  %v584 = vunpack.c.l.b16 %v433
  %v585 = vunpack.c.h.b16 %v433
  %v586 = vunpack.c.l.b16 %v434
  %v587 = vunpack.c.h.b16 %v434
  %v588 = vunpack.c.l.b16 %v435
  %v589 = vunpack.c.h.b16 %v435
  %v590 = vunpack.c.l.b16 %v436
  %v591 = vunpack.c.h.b16 %v436
  %v592 = vunpack.c.l.b16 %v437
  %v593 = vunpack.c.h.b16 %v437
  %v594 = vunpack.c.l.b16 %v438
  %v595 = vunpack.c.h.b16 %v438
  %v596 = vunpack.c.l.b16 %v439
  %v597 = vunpack.c.h.b16 %v439
  %v598 = vunpack.c.l.b16 %v440
  %v599 = vunpack.c.h.b16 %v440
  %v600 = vunpack.c.l.b16 %v441
  %v601 = vunpack.c.h.b16 %v441
  %v602 = vunpack.c.l.b16 %v442
  %v603 = vunpack.c.h.b16 %v442
  %v604 = vunpack.c.l.b16 %v443
  %v605 = vunpack.c.h.b16 %v443
  %v606 = vunpack.c.l.b16 %v444
  %v607 = vunpack.c.h.b16 %v444
  %v608 = vunpack.c.l.b16 %v445
  %v609 = vunpack.c.h.b16 %v445
  %v610 = vunpack.c.l.b16 %v446
  %v611 = vunpack.c.h.b16 %v446
  %v612 = vunpack.c.l.b16 %v447
  %v613 = vunpack.c.h.b16 %v447
  %v614 = vunpack.c.l.b16 %v448
  %v615 = vunpack.c.h.b16 %v448
  %v616 = vunpack.c.l.b16 %v449
  %v617 = vunpack.c.h.b16 %v449
  %v618 = vunpack.c.l.b16 %v450
  %v619 = vunpack.c.h.b16 %v450
  %v620 = vunpack.c.l.b16 %v451
  %v621 = vunpack.c.h.b16 %v451
  %v622 = vunpack.c.l.b16 %v452
  %v623 = vunpack.c.h.b16 %v452
  %v624 = vunpack.c.l.b16 %v453
  %v625 = vunpack.c.h.b16 %v453
  %v626 = vunpack.c.l.b16 %v454
  %v627 = vunpack.c.h.b16 %v454
  %v628 = vunpack.c.l.b16 %v455
  %v629 = vunpack.c.h.b16 %v455
  %v630 = vunpack.c.l.b16 %v456
  %v631 = vunpack.c.h.b16 %v456
  %v632 = vunpack.c.l.b16 %v457
  %v633 = vunpack.c.h.b16 %v457
  %v634 = vunpack.c.l.b16 %v458
  %v635 = vunpack.c.h.b16 %v458
  %v636 = vunpack.c.l.b16 %v459
  %v637 = vunpack.c.h.b16 %v459
  %v638 = vunpack.c.l.b16 %v460
  %v639 = vunpack.c.h.b16 %v460
  %v640 = vunpack.c.l.b16 %v461
  %v641 = vunpack.c.h.b16 %v461
  %v642 = vunpack.c.l.b16 %v462
  %v643 = vunpack.c.h.b16 %v462
  %v644 = vunpack.c.l.b16 %v463
  %v645 = vunpack.c.h.b16 %v463
  %v646 = vunpack.c.l.b16 %v464
  %v647 = vunpack.c.h.b16 %v464
  %v648 = vunpack.c.l.b16 %v465
  %v649 = vunpack.c.h.b16 %v465
  %v650 = vunpack.c.l.b16 %v466
  %v651 = vunpack.c.h.b16 %v466
  %v652 = vunpack.c.l.b16 %v467
  %v653 = vunpack.c.h.b16 %v467
  %v654 = vunpack.c.l.b16 %v468
  %v655 = vunpack.c.h.b16 %v468
  %v656 = vunpack.c.l.b16 %v469
  %v657 = vunpack.c.h.b16 %v469
  %v658 = vunpack.c.l.b16 %v470
  %v659 = vunpack.c.h.b16 %v470
  %v660 = vunpack.c.l.b16 %v471
  %v661 = vunpack.c.h.b16 %v471
  %v662 = vunpack.c.l.b16 %v472
  %v663 = vunpack.c.h.b16 %v472
  %v664 = vunpack.c.l.b16 %v473
  %v665 = vunpack.c.h.b16 %v473
  %v666 = vunpack.c.l.b16 %v474
  %v667 = vunpack.c.h.b16 %v474
  %v668 = vunpack.c.l.b16 %v475
  %v669 = vunpack.c.h.b16 %v475
  %v670 = vunpack.c.l.b16 %v476
  %v671 = vunpack.c.h.b16 %v476
  %v672 = vunpack.c.l.b16 %v477
  %v673 = vunpack.c.h.b16 %v477
  %v674 = vunpack.c.l.b16 %v478
  %v675 = vunpack.c.h.b16 %v478
  %v676 = vunpack.c.l.b16 %v479
  %v677 = vunpack.c.h.b16 %v479
  %v678 = vpack.c.b16 %v552, %v550
  %v679 = vpack.c.b16 %v553, %v551
  %v680 = vpack.c.b16 %v556, %v554
  %v681 = vpack.c.b16 %v557, %v555
  %v682 = vpack.c.b16 %v560, %v558
  %v683 = vpack.c.b16 %v561, %v559
  %v684 = vpack.c.b16 %v564, %v562
  %v685 = vpack.c.b16 %v565, %v563
  %v686 = vpack.c.b16 %v568, %v566
  %v687 = vpack.c.b16 %v569, %v567
  %v688 = vpack.c.b16 %v572, %v570
  %v689 = vpack.c.b16 %v573, %v571
  %v690 = vpack.c.b16 %v576, %v574
  %v691 = vpack.c.b16 %v577, %v575
  %v692 = vpack.c.b16 %v580, %v578
  %v693 = vpack.c.b16 %v581, %v579
  %v694 = vpack.c.b16 %v584, %v582
  %v695 = vpack.c.b16 %v585, %v583
  %v696 = vpack.c.b16 %v588, %v586
  %v697 = vpack.c.b16 %v589, %v587
  %v698 = vpack.c.b16 %v592, %v590
  %v699 = vpack.c.b16 %v593, %v591
  %v700 = vpack.c.b16 %v596, %v594
  %v701 = vpack.c.b16 %v597, %v595
  %v702 = vpack.c.b16 %v600, %v598
  %v703 = vpack.c.b16 %v601, %v599
  %v704 = vpack.c.b16 %v604, %v602
  %v705 = vpack.c.b16 %v605, %v603
  %v706 = vpack.c.b16 %v608, %v606
  %v707 = vpack.c.b16 %v609, %v607
  %v708 = vpack.c.b16 %v612, %v610
  %v709 = vpack.c.b16 %v613, %v611
  %v710 = vpack.c.b16 %v616, %v614
  %v711 = vpack.c.b16 %v617, %v615
  %v712 = vpack.c.b16 %v620, %v618
  %v713 = vpack.c.b16 %v621, %v619
  %v714 = vpack.c.b16 %v624, %v622
  %v715 = vpack.c.b16 %v625, %v623
  %v716 = vpack.c.b16 %v628, %v626
  %v717 = vpack.c.b16 %v629, %v627
  %v718 = vpack.c.b16 %v632, %v630
  %v719 = vpack.c.b16 %v633, %v631
  %v720 = vpack.c.b16 %v636, %v634
  %v721 = vpack.c.b16 %v637, %v635
  %v722 = vpack.c.b16 %v640, %v638
  %v723 = vpack.c.b16 %v641, %v639
  %v724 = vpack.c.b16 %v644, %v642
  %v725 = vpack.c.b16 %v645, %v643
  %v726 = vpack.c.b16 %v648, %v646
  %v727 = vpack.c.b16 %v649, %v647
  %v728 = vpack.c.b16 %v652, %v650
  %v729 = vpack.c.b16 %v653, %v651
  %v730 = vpack.c.b16 %v656, %v654
  %v731 = vpack.c.b16 %v657, %v655
  %v732 = vpack.c.b16 %v660, %v658
  %v733 = vpack.c.b16 %v661, %v659
  %v734 = vpack.c.b16 %v664, %v662
  %v735 = vpack.c.b16 %v665, %v663
  %v736 = vpack.c.b16 %v668, %v666
  %v737 = vpack.c.b16 %v669, %v667
  %v738 = vpack.c.b16 %v672, %v670
  %v739 = vpack.c.b16 %v673, %v671
  %v740 = vpack.c.b16 %v676, %v674
  %v741 = vpack.c.b16 %v677, %v675
  %806 = vmatpush.bf16.msra.mxu0 %v692
  %807 = vmatpush.bf16.msra.mxu0 %v690
  %808 = vmatpush.bf16.msra.mxu0 %v688
  %809 = vmatpush.bf16.msra.mxu0 %v686
  %810 = vmatpush.bf16.msra.mxu0 %v684
  %811 = vmatpush.bf16.msra.mxu0 %v682
  %812 = vmatpush.bf16.msra.mxu0 %v680
  %813 = vmatpush.bf16.msra.mxu0 %v678
  %814 = vmatmul.bf16.gmra.mxu0 %v412
  %v815 = vpop.f32.mrf.mxu0
  %v816 = vadd.f32 %v482, %v815
  %v817 = vpop.f32.mrf.mxu0
  %v818 = vadd.f32 %v482, %v817
  %819 = vdwg.mxu0
  %820 = vmatpush.bf16.msra.mxu0 %v708
  %821 = vmatpush.bf16.msra.mxu0 %v706
  %822 = vmatpush.bf16.msra.mxu0 %v704
  %823 = vmatpush.bf16.msra.mxu0 %v702
  %824 = vmatpush.bf16.msra.mxu0 %v700
  %825 = vmatpush.bf16.msra.mxu0 %v698
  %826 = vmatpush.bf16.msra.mxu0 %v696
  %827 = vmatpush.bf16.msra.mxu0 %v694
  %828 = vmatmul.bf16.gmra.mxu0 %v413
  %v829 = vpop.f32.mrf.mxu0
  %v830 = vadd.f32 %v816, %v829
  %v831 = vpop.f32.mrf.mxu0
  %v832 = vadd.f32 %v818, %v831
  %833 = vdwg.mxu0
  %834 = vmatpush.bf16.msra.mxu0 %v724
  %835 = vmatpush.bf16.msra.mxu0 %v722
  %836 = vmatpush.bf16.msra.mxu0 %v720
  %837 = vmatpush.bf16.msra.mxu0 %v718
  %838 = vmatpush.bf16.msra.mxu0 %v716
  %839 = vmatpush.bf16.msra.mxu0 %v714
  %840 = vmatpush.bf16.msra.mxu0 %v712
  %841 = vmatpush.bf16.msra.mxu0 %v710
  %842 = vmatmul.bf16.gmra.mxu0 %v414
  %v843 = vpop.f32.mrf.mxu0
  %v844 = vadd.f32 %v830, %v843
  %v845 = vpop.f32.mrf.mxu0
  %v846 = vadd.f32 %v832, %v845
  %847 = vdwg.mxu0
  %848 = vmatpush.bf16.msra.mxu0 %v740
  %849 = vmatpush.bf16.msra.mxu0 %v738
  %850 = vmatpush.bf16.msra.mxu0 %v736
  %851 = vmatpush.bf16.msra.mxu0 %v734
  %852 = vmatpush.bf16.msra.mxu0 %v732
  %853 = vmatpush.bf16.msra.mxu0 %v730
  %854 = vmatpush.bf16.msra.mxu0 %v728
  %855 = vmatpush.bf16.msra.mxu0 %v726
  %856 = vmatmul.bf16.gmra.mxu0 %v415
  %v857 = vpop.f32.mrf.mxu0
  %v858 = vadd.f32 %v844, %v857
  %v859 = vpop.f32.mrf.mxu0
  %v860 = vadd.f32 %v846, %v859
  %861 = vdwg.mxu0
  %862 = vmatpush.bf16.msra.mxu0 %v693
  %863 = vmatpush.bf16.msra.mxu0 %v691
  %864 = vmatpush.bf16.msra.mxu0 %v689
  %865 = vmatpush.bf16.msra.mxu0 %v687
  %866 = vmatpush.bf16.msra.mxu0 %v685
  %867 = vmatpush.bf16.msra.mxu0 %v683
  %868 = vmatpush.bf16.msra.mxu0 %v681
  %869 = vmatpush.bf16.msra.mxu0 %v679
  %870 = vmatmul.bf16.gmra.mxu0 %v412
  %v871 = vpop.f32.mrf.mxu0
  %v872 = vadd.f32 %v483, %v871
  %v873 = vpop.f32.mrf.mxu0
  %v874 = vadd.f32 %v483, %v873
  %875 = vdwg.mxu0
  %876 = vmatpush.bf16.msra.mxu0 %v709
  %877 = vmatpush.bf16.msra.mxu0 %v707
  %878 = vmatpush.bf16.msra.mxu0 %v705
  %879 = vmatpush.bf16.msra.mxu0 %v703
  %880 = vmatpush.bf16.msra.mxu0 %v701
  %881 = vmatpush.bf16.msra.mxu0 %v699
  %882 = vmatpush.bf16.msra.mxu0 %v697
  %883 = vmatpush.bf16.msra.mxu0 %v695
  %884 = vmatmul.bf16.gmra.mxu0 %v413
  %v885 = vpop.f32.mrf.mxu0
  %v886 = vadd.f32 %v872, %v885
  %v887 = vpop.f32.mrf.mxu0
  %v888 = vadd.f32 %v874, %v887
  %889 = vdwg.mxu0
  %890 = vmatpush.bf16.msra.mxu0 %v725
  %891 = vmatpush.bf16.msra.mxu0 %v723
  %892 = vmatpush.bf16.msra.mxu0 %v721
  %893 = vmatpush.bf16.msra.mxu0 %v719
  %894 = vmatpush.bf16.msra.mxu0 %v717
  %895 = vmatpush.bf16.msra.mxu0 %v715
  %896 = vmatpush.bf16.msra.mxu0 %v713
  %897 = vmatpush.bf16.msra.mxu0 %v711
  %898 = vmatmul.bf16.gmra.mxu0 %v414
  %v899 = vpop.f32.mrf.mxu0
  %v900 = vadd.f32 %v886, %v899
  %v901 = vpop.f32.mrf.mxu0
  %v902 = vadd.f32 %v888, %v901
  %903 = vdwg.mxu0
  %904 = vmatpush.bf16.msra.mxu0 %v741
  %905 = vmatpush.bf16.msra.mxu0 %v739
  %906 = vmatpush.bf16.msra.mxu0 %v737
  %907 = vmatpush.bf16.msra.mxu0 %v735
  %908 = vmatpush.bf16.msra.mxu0 %v733
  %909 = vmatpush.bf16.msra.mxu0 %v731
  %910 = vmatpush.bf16.msra.mxu0 %v729
  %911 = vmatpush.bf16.msra.mxu0 %v727
  %912 = vmatmul.bf16.gmra.mxu0 %v415
  %v913 = vpop.f32.mrf.mxu0
  %v914 = vadd.f32 %v900, %v913
  %v915 = vpop.f32.mrf.mxu0
  %v916 = vadd.f32 %v902, %v915
  %917 = vdwg.mxu0
  %919 = vset.pattern.permute.xlu0 0
  %920 = vperm.xlu0 %919, %v410
  %v921 = vpop.permute.xlu0 %920
  %924 = vset.pattern.permute.xlu0 0
  %925 = vperm.xlu0 %924, %v411
  %v926 = vpop.permute.xlu0 %925
  %v928 = vmul.f32 %v921, %v914
  %v929 = vmul.f32 %v926, %v916
  %v930 = vadd.f32 %v858, %v928
  %v931 = vadd.f32 %v860, %v929
  %932 = vst [vmem:[%s7] sm:$0xff] %v930
  %933 = vst [vmem:[%s7 + $0x8] sm:$0xff] %v931
  // Predicated region
  $region30: #{noisy_dqn_forward.7} parent=0 // pred_check
    _
  $region31: #{noisy_dqn_forward.7} parent=0 // pred_check_branch
    %935 = sbr.rel (0) target = $region33
  $region32: #{noisy_dqn_forward.7} parent=0 // pred_region
    _
  $region33: #{noisy_dqn_forward.7} parent=0 // pred_fallthru
    _
  // Predicated region
  $region34: #{noisy_dqn_forward.7} parent=0 // pred_check
    _
  $region35: #{noisy_dqn_forward.7} parent=0 // pred_check_branch
    %937 = sbr.rel (0) target = $region37
  $region36: #{noisy_dqn_forward.7} parent=0 // pred_region
    _
  $region37: #{noisy_dqn_forward.7} parent=0 // pred_fallthru
    _

</llo_original>
